<compile_context>
chip_gen: v7x
topology: tpu7x:2x2x1
jax: 0.10.0
libtpu: 0.0.40
codegen_flags: <defaults>
</compile_context>

<pallas_src>
import functools

import jax
import jax.numpy as jnp
from jax.experimental import pallas as pl
from jax.experimental.pallas import tpu as pltpu


def _round_up(a: int, b: int) -> int:
    return ((a + b - 1) // b) * b


# ---------------------------------------------------------------------------
# Kernel 1: one Chebyshev propagation step
#   T_next = alpha * (L @ T_prev) + beta * T_sub
# tiled over (node-row tiles, L-contraction tiles) with an f32 VMEM accumulator.
# ---------------------------------------------------------------------------
def _cheb_propagate_kernel(L_ref, tprev_ref, tsub_ref, out_ref, acc_ref, *, alpha, beta):
    j = pl.program_id(1)

    @pl.when(j == 0)
    def _init():
        acc_ref[...] = jnp.zeros_like(acc_ref)

    acc_ref[...] += jnp.dot(L_ref[...], tprev_ref[...],
                            preferred_element_type=jnp.float32)

    @pl.when(j == pl.num_programs(1) - 1)
    def _finalize():
        res = acc_ref[...]
        if alpha != 1.0:
            res = alpha * res
        if beta != 0.0:
            res = res + beta * tsub_ref[...].astype(jnp.float32)
        out_ref[...] = res.astype(out_ref.dtype)


def _propagate(L_pad, t_prev, t_sub, alpha, beta, *, block):
    n_pad, cin = t_prev.shape
    grid = (n_pad // block, n_pad // block)
    bytes_l = n_pad * n_pad * jnp.dtype(L_pad.dtype).itemsize
    bytes_t = 3 * n_pad * cin * jnp.dtype(t_prev.dtype).itemsize
    cost = pl.CostEstimate(flops=2 * n_pad * n_pad * cin,
                           transcendentals=0,
                           bytes_accessed=bytes_l + bytes_t)
    return pl.pallas_call(
        functools.partial(_cheb_propagate_kernel, alpha=alpha, beta=beta),
        out_shape=jax.ShapeDtypeStruct((n_pad, cin), t_prev.dtype),
        grid=grid,
        in_specs=[
            pl.BlockSpec((block, block), lambda i, j: (i, j)),   # L tile (streamed)
            pl.BlockSpec((block, cin), lambda i, j: (j, 0)),     # T_prev contraction slice
            pl.BlockSpec((block, cin), lambda i, j: (i, 0)),     # T_sub row slice
        ],
        out_specs=pl.BlockSpec((block, cin), lambda i, j: (i, 0)),
        scratch_shapes=[pltpu.VMEM((block, cin), jnp.float32)],
        compiler_params=pltpu.CompilerParams(
            dimension_semantics=("parallel", "arbitrary"),
            vmem_limit_bytes=64 * 1024 * 1024,
        ),
        cost_estimate=cost,
    )(L_pad, t_prev, t_sub)


# ---------------------------------------------------------------------------
# Kernel 2: fused per-tap projection (single lane-dense matmul)
#   out = [Tx_0 | ... | Tx_{Kw-1}] @ W_fused + bias
# ---------------------------------------------------------------------------
def _cheb_project_kernel(slab_ref, w_ref, b_ref, o_ref):
    acc = jnp.dot(slab_ref[...], w_ref[...], preferred_element_type=jnp.float32)
    o_ref[...] = (acc + b_ref[...]).astype(o_ref.dtype)


def _project(slab, w_fused, bias2d, out_dtype, *, block):
    n_pad, kc = slab.shape
    _, cout_pad = w_fused.shape
    cost = pl.CostEstimate(
        flops=2 * n_pad * kc * cout_pad,
        transcendentals=0,
        bytes_accessed=(n_pad * kc * jnp.dtype(slab.dtype).itemsize
                        + kc * cout_pad * jnp.dtype(w_fused.dtype).itemsize
                        + n_pad * cout_pad * jnp.dtype(out_dtype).itemsize),
    )
    return pl.pallas_call(
        _cheb_project_kernel,
        out_shape=jax.ShapeDtypeStruct((n_pad, cout_pad), out_dtype),
        grid=(n_pad // block,),
        in_specs=[
            pl.BlockSpec((block, kc), lambda i: (i, 0)),
            pl.BlockSpec((kc, cout_pad), lambda i: (0, 0)),
            pl.BlockSpec((1, cout_pad), lambda i: (0, 0)),
        ],
        out_specs=pl.BlockSpec((block, cout_pad), lambda i: (i, 0)),
        compiler_params=pltpu.CompilerParams(
            dimension_semantics=("parallel",),
            vmem_limit_bytes=64 * 1024 * 1024,
        ),
        cost_estimate=cost,
    )(slab, w_fused, bias2d)


# ---------------------------------------------------------------------------
# Plain-JAX glue: degree normalization + scatter of edge weights into dense L.
# ---------------------------------------------------------------------------
# TODO(synk): for genuinely sparse graphs, replace the dense L with a CSR edge-tile
# gather kernel (PrefetchScalarGridSpec scalar-prefetching neighbor offsets) instead
# of densifying; the dense form streams (Kw-1)*N^2 bytes regardless of sparsity.
def _build_dense_laplacian(x, edge_index, edge_attr, n_pad, compute_dtype):
    """Matches the PyTorch module: deg counts edges (unweighted) even with edge_attr;
    lap = -deg^-1/2[row] * edge_attr * deg^-1/2[col], scattered (duplicates summed)."""
    n = x.shape[0]
    row, col = edge_index[0], edge_index[1]
    e = row.shape[0]
    if edge_attr is None:
        edge_attr = jnp.ones((e,), dtype=jnp.float32)
    deg = jnp.zeros((n,), jnp.float32).at[row].add(jnp.ones((e,), jnp.float32))
    deg_inv_sqrt = jnp.where(deg > 0, jax.lax.rsqrt(deg), 0.0)  # inf -> 0
    lap = -deg_inv_sqrt[row] * edge_attr.astype(jnp.float32) * deg_inv_sqrt[col]
    dense = jnp.zeros((n_pad, n_pad), jnp.float32).at[row, col].add(lap)
    return dense.astype(compute_dtype)


def cheb_conv_forward(x, edge_index, weight, bias=None, edge_attr=None,
                      compute_dtype=jnp.bfloat16, block=512):
    """ChebConv forward.  weight: (K+1, Cin, Cout) as in the PyTorch module
    (the module's forward uses all K+1 taps)."""
    n, cin = x.shape
    kw, _, cout = weight.shape

    block = min(block, _round_up(n, 128))   # lane-aligned square L tile, clamped
    n_pad = _round_up(n, block)             # zero-pad nodes to a whole number of tiles
    cout_pad = _round_up(cout, 128)         # lane-dense output stores

    lap = _build_dense_laplacian(x, edge_index, edge_attr, n_pad, compute_dtype)
    x_pad = jnp.pad(x.astype(compute_dtype), ((0, n_pad - n), (0, 0)))

    # Chebyshev recurrence: Tx_0 = x, Tx_1 = L x, Tx_k = 2 L Tx_{k-1} - Tx_{k-2}.
    taps = [x_pad]
    if kw > 1:
        taps.append(_propagate(lap, x_pad, x_pad, 1.0, 0.0, block=block))
    for _ in range(2, kw):
        taps.append(_propagate(lap, taps[-1], taps[-2], 2.0, -1.0, block=block))

    slab = taps[0] if kw == 1 else jnp.concatenate(taps, axis=1)  # (n_pad, kw*cin)

    w_fused = weight.astype(compute_dtype).reshape(kw * cin, cout)
    w_fused = jnp.pad(w_fused, ((0, 0), (0, cout_pad - cout)))
    if bias is None:
        bias = jnp.zeros((cout,), jnp.float32)
    b_pad = jnp.pad(bias.astype(jnp.float32).reshape(1, cout),
                    ((0, 0), (0, cout_pad - cout)))

    out_pad = _project(slab, w_fused, b_pad, x.dtype, block=block)
    return out_pad[:n, :cout]


def cheb_conv_reference(x, edge_index, weight, bias=None, edge_attr=None,
                        compute_dtype=jnp.float32):
    """Pure-JAX reference mirroring the PyTorch forward (optionally with the same
    bf16 cast points as the kernel path, for tight numerical comparison)."""
    n = x.shape[0]
    kw = weight.shape[0]
    L = _build_dense_laplacian(x, edge_index, edge_attr, n, compute_dtype)
    xc = x.astype(compute_dtype)
    wc = weight.astype(compute_dtype)

    Tx0 = xc
    out = jnp.dot(Tx0, wc[0], preferred_element_type=jnp.float32)
    Tx1 = xc
    if kw > 1:
        Tx1 = jnp.dot(L, xc, preferred_element_type=jnp.float32).astype(compute_dtype)
        out = out + jnp.dot(Tx1, wc[1], preferred_element_type=jnp.float32)
    for k in range(2, kw):
        Tx2f = (2.0 * jnp.dot(L, Tx1, preferred_element_type=jnp.float32)
                - Tx0.astype(jnp.float32))
        Tx2 = Tx2f.astype(compute_dtype)
        out = out + jnp.dot(Tx2, wc[k], preferred_element_type=jnp.float32)
        Tx0, Tx1 = Tx1, Tx2
    if bias is not None:
        out = out + bias.astype(jnp.float32)
    return out.astype(x.dtype)


if __name__ == "__main__":
    # Small but non-trivial problem: 300 nodes (exercises row padding to 384),
    # Cin=16, Cout=48 (exercises lane padding to 128), K=3 -> Kw=4 taps, 1200 edges.
    N, Cin, Cout, K = 300, 16, 48, 3
    E = 1200
    Kw = K + 1  # the module allocates K+1 weight taps and its forward uses all of them

    key = jax.random.PRNGKey(0)
    k1, k2, k3, k4, k5 = jax.random.split(key, 5)
    x = jax.random.normal(k1, (N, Cin), dtype=jnp.float32)
    row = jax.random.randint(k2, (E,), 0, N)
    col = jax.random.randint(k3, (E,), 0, N)
    edge_index = jnp.stack([row, col], axis=0)

    # reset_parameters(): uniform(-1/sqrt(in_channels*(K+1)), +...)
    bound = 1.0 / float(Cin * Kw) ** 0.5
    weight = jax.random.uniform(k4, (Kw, Cin, Cout), minval=-bound, maxval=bound,
                                dtype=jnp.float32)
    bias = jax.random.uniform(k5, (Cout,), minval=-bound, maxval=bound,
                              dtype=jnp.float32)

    # f32 path: exact-semantics check of the tiled kernels vs the pure-JAX reference.
    fwd_f32 = jax.jit(functools.partial(cheb_conv_forward,
                                        compute_dtype=jnp.float32, block=128))
    out_f32 = jax.block_until_ready(fwd_f32(x, edge_index, weight, bias))
    ref_f32 = cheb_conv_reference(x, edge_index, weight, bias,
                                  compute_dtype=jnp.float32)
    assert out_f32.shape == (N, Cout)
    assert jnp.allclose(out_f32, ref_f32, atol=1e-4, rtol=1e-4), "f32 kernel mismatch"

    # bf16 path (performance default: halves the memory-bound L stream), checked
    # against a reference applying the same bf16 cast points.
    fwd_bf16 = jax.jit(functools.partial(cheb_conv_forward,
                                         compute_dtype=jnp.bfloat16, block=128))
    out_bf16 = jax.block_until_ready(fwd_bf16(x, edge_index, weight, bias))
    ref_bf16 = cheb_conv_reference(x, edge_index, weight, bias,
                                   compute_dtype=jnp.bfloat16)
    assert out_bf16.shape == (N, Cout)
    assert jnp.allclose(out_bf16, ref_bf16, atol=2e-2, rtol=2e-2), "bf16 kernel mismatch"

    print("KERNEL_OK")
</pallas_src>

<mosaic_0001>
module attributes {stable_mosaic.version = 11 : i64} {
  func.func private @main(%arg0: i32) attributes {dimension_semantics = [#tpu.dimension_semantics<core_parallel>], iteration_bounds = array<i64: 2>, tpu.core_type = #tpu.core_type<sc_scalar_subcore>, window_params = []} {
    return
  }
}

module attributes {stable_mosaic.version = 11 : i64} {
  func.func private @main(%arg0: i32) attributes {dimension_semantics = [#tpu.dimension_semantics<core_parallel>], iteration_bounds = array<i64: 2>, tpu.core_type = #tpu.core_type<sc_scalar_subcore>, window_params = []} {
    return
  }
}

module attributes {stable_mosaic.version = 11 : i64} {
  func.func @_cheb_propagate_kernel(%arg0: i32, %arg1: i32, %arg2: memref<128x128xf32, #tpu.memory_space<vmem>>, %arg3: memref<128x16xf32, #tpu.memory_space<vmem>>, %arg4: memref<128x16xf32, #tpu.memory_space<vmem>>, %arg5: memref<128x16xf32, #tpu.memory_space<vmem>>, %arg6: memref<128x16xf32, #tpu.memory_space<vmem>>) attributes {dimension_semantics = [#tpu.dimension_semantics<parallel>, #tpu.dimension_semantics<arbitrary>], iteration_bounds = array<i64: 3, 3>, scalar_prefetch = 0 : i64, scratch_operands = 1 : i64, tpu.core_type = #tpu.core_type<tc>, window_params = [{transform_indices = @transform_0, window_bounds = array<i64: 128, 128>}, {transform_indices = @transform_1, window_bounds = array<i64: 128, 16>}, {transform_indices = @transform_2, window_bounds = array<i64: 128, 16>}, {transform_indices = @transform_3, window_bounds = array<i64: 128, 16>}]} {
    %c0_i32 = arith.constant 0 : i32
    %0 = arith.cmpi eq, %arg1, %c0_i32 : i32
    %1 = arith.extui %0 : i1 to i32
    %c0_i32_0 = arith.constant 0 : i32
    %2 = arith.cmpi ne, %1, %c0_i32_0 : i32
    scf.if %2 {
      %cst_9 = arith.constant 0.000000e+00 : f32
      %12 = vector.broadcast %cst_9 : f32 to vector<128x16xf32>
      %c0_10 = arith.constant 0 : index
      %c0_11 = arith.constant 0 : index
      %13 = vector.load %arg6[%c0_10, %c0_11] : memref<128x16xf32, #tpu.memory_space<vmem>>, vector<128x16xf32>
      tpu.vector_store %arg6[%c0_10, %c0_11], %12 {strides = array<i32>} : memref<128x16xf32, #tpu.memory_space<vmem>>, vector<128x16xf32>,
    } else {
    }
    %c0 = arith.constant 0 : index
    %c0_1 = arith.constant 0 : index
    %3 = vector.load %arg6[%c0, %c0_1] : memref<128x16xf32, #tpu.memory_space<vmem>>, vector<128x16xf32>
    %c0_2 = arith.constant 0 : index
    %c0_3 = arith.constant 0 : index
    %4 = vector.load %arg2[%c0_2, %c0_3] : memref<128x128xf32, #tpu.memory_space<vmem>>, vector<128x128xf32>
    %c0_4 = arith.constant 0 : index
    %c0_5 = arith.constant 0 : index
    %5 = vector.load %arg3[%c0_4, %c0_5] : memref<128x16xf32, #tpu.memory_space<vmem>>, vector<128x16xf32>
    %cst = arith.constant dense<0.000000e+00> : vector<128x16xf32>
    %6 = tpu.matmul %4, %5, %cst {dimension_numbers = #tpu.dot_dimension_numbers<[1], [0], [0], [1], [0, 0, 1, 1], [], []>} : vector<128x128xf32>, vector<128x16xf32>, vector<128x16xf32> -> vector<128x16xf32>
    %7 = arith.addf %3, %6 : vector<128x16xf32>
    %c0_6 = arith.constant 0 : index
    %c0_7 = arith.constant 0 : index
    %8 = vector.load %arg6[%c0_6, %c0_7] : memref<128x16xf32, #tpu.memory_space<vmem>>, vector<128x16xf32>
    tpu.vector_store %arg6[%c0_6, %c0_7], %7 {strides = array<i32>} : memref<128x16xf32, #tpu.memory_space<vmem>>, vector<128x16xf32>,
    %c2_i32 = arith.constant 2 : i32
    %9 = arith.cmpi eq, %arg1, %c2_i32 : i32
    %10 = arith.extui %9 : i1 to i32
    %c0_i32_8 = arith.constant 0 : i32
    %11 = arith.cmpi ne, %10, %c0_i32_8 : i32
    scf.if %11 {
      %c0_9 = arith.constant 0 : index
      %c0_10 = arith.constant 0 : index
      %12 = vector.load %arg6[%c0_9, %c0_10] : memref<128x16xf32, #tpu.memory_space<vmem>>, vector<128x16xf32>
      %c0_11 = arith.constant 0 : index
      %c0_12 = arith.constant 0 : index
      %13 = vector.load %arg5[%c0_11, %c0_12] : memref<128x16xf32, #tpu.memory_space<vmem>>, vector<128x16xf32>
      tpu.vector_store %arg5[%c0_11, %c0_12], %12 {strides = array<i32>} : memref<128x16xf32, #tpu.memory_space<vmem>>, vector<128x16xf32>,
    } else {
    }
    return
  }
  func.func @transform_0(%arg0: i32, %arg1: i32) -> (i32, i32) {
    %c0_i32 = arith.constant 0 : i32
    return %arg0, %arg1 : i32, i32
  }
  func.func @transform_1(%arg0: i32, %arg1: i32) -> (i32, i32) {
    %c0_i32 = arith.constant 0 : i32
    %c0_i32_0 = arith.constant 0 : i32
    return %arg1, %c0_i32 : i32, i32
  }
  func.func @transform_2(%arg0: i32, %arg1: i32) -> (i32, i32) {
    %c0_i32 = arith.constant 0 : i32
    %c0_i32_0 = arith.constant 0 : i32
    return %arg0, %c0_i32 : i32, i32
  }
  func.func @transform_3(%arg0: i32, %arg1: i32) -> (i32, i32) {
    %c0_i32 = arith.constant 0 : i32
    %c0_i32_0 = arith.constant 0 : i32
    return %arg0, %c0_i32 : i32, i32
  }
}

module attributes {stable_mosaic.version = 11 : i64} {
  func.func @_cheb_propagate_kernel(%arg0: i32, %arg1: i32, %arg2: memref<128x128xf32, #tpu.memory_space<vmem>>, %arg3: memref<128x16xf32, #tpu.memory_space<vmem>>, %arg4: memref<128x16xf32, #tpu.memory_space<vmem>>, %arg5: memref<128x16xf32, #tpu.memory_space<vmem>>, %arg6: memref<128x16xf32, #tpu.memory_space<vmem>>) attributes {dimension_semantics = [#tpu.dimension_semantics<parallel>, #tpu.dimension_semantics<arbitrary>], iteration_bounds = array<i64: 3, 3>, scalar_prefetch = 0 : i64, scratch_operands = 1 : i64, tpu.core_type = #tpu.core_type<tc>, window_params = [{transform_indices = @transform_0, window_bounds = array<i64: 128, 128>}, {transform_indices = @transform_1, window_bounds = array<i64: 128, 16>}, {transform_indices = @transform_2, window_bounds = array<i64: 128, 16>}, {transform_indices = @transform_3, window_bounds = array<i64: 128, 16>}]} {
    %c0_i32 = arith.constant 0 : i32
    %0 = arith.cmpi eq, %arg1, %c0_i32 : i32
    %1 = arith.extui %0 : i1 to i32
    %c0_i32_0 = arith.constant 0 : i32
    %2 = arith.cmpi ne, %1, %c0_i32_0 : i32
    scf.if %2 {
      %cst_9 = arith.constant 0.000000e+00 : f32
      %12 = vector.broadcast %cst_9 : f32 to vector<128x16xf32>
      %c0_10 = arith.constant 0 : index
      %c0_11 = arith.constant 0 : index
      %13 = vector.load %arg6[%c0_10, %c0_11] : memref<128x16xf32, #tpu.memory_space<vmem>>, vector<128x16xf32>
      tpu.vector_store %arg6[%c0_10, %c0_11], %12 {strides = array<i32>} : memref<128x16xf32, #tpu.memory_space<vmem>>, vector<128x16xf32>,
    } else {
    }
    %c0 = arith.constant 0 : index
    %c0_1 = arith.constant 0 : index
    %3 = vector.load %arg6[%c0, %c0_1] : memref<128x16xf32, #tpu.memory_space<vmem>>, vector<128x16xf32>
    %c0_2 = arith.constant 0 : index
    %c0_3 = arith.constant 0 : index
    %4 = vector.load %arg2[%c0_2, %c0_3] : memref<128x128xf32, #tpu.memory_space<vmem>>, vector<128x128xf32>
    %c0_4 = arith.constant 0 : index
    %c0_5 = arith.constant 0 : index
    %5 = vector.load %arg3[%c0_4, %c0_5] : memref<128x16xf32, #tpu.memory_space<vmem>>, vector<128x16xf32>
    %cst = arith.constant dense<0.000000e+00> : vector<128x16xf32>
    %6 = tpu.matmul %4, %5, %cst {dimension_numbers = #tpu.dot_dimension_numbers<[1], [0], [0], [1], [0, 0, 1, 1], [], []>} : vector<128x128xf32>, vector<128x16xf32>, vector<128x16xf32> -> vector<128x16xf32>
    %7 = arith.addf %3, %6 : vector<128x16xf32>
    %c0_6 = arith.constant 0 : index
    %c0_7 = arith.constant 0 : index
    %8 = vector.load %arg6[%c0_6, %c0_7] : memref<128x16xf32, #tpu.memory_space<vmem>>, vector<128x16xf32>
    tpu.vector_store %arg6[%c0_6, %c0_7], %7 {strides = array<i32>} : memref<128x16xf32, #tpu.memory_space<vmem>>, vector<128x16xf32>,
    %c2_i32 = arith.constant 2 : i32
    %9 = arith.cmpi eq, %arg1, %c2_i32 : i32
    %10 = arith.extui %9 : i1 to i32
    %c0_i32_8 = arith.constant 0 : i32
    %11 = arith.cmpi ne, %10, %c0_i32_8 : i32
    scf.if %11 {
      %c0_9 = arith.constant 0 : index
      %c0_10 = arith.constant 0 : index
      %12 = vector.load %arg6[%c0_9, %c0_10] : memref<128x16xf32, #tpu.memory_space<vmem>>, vector<128x16xf32>
      %cst_11 = arith.constant 2.000000e+00 : f32
      %13 = vector.broadcast %cst_11 : f32 to vector<128x16xf32>
      %14 = arith.mulf %13, %12 : vector<128x16xf32>
      %c0_12 = arith.constant 0 : index
      %c0_13 = arith.constant 0 : index
      %15 = vector.load %arg4[%c0_12, %c0_13] : memref<128x16xf32, #tpu.memory_space<vmem>>, vector<128x16xf32>
      %cst_14 = arith.constant -1.000000e+00 : f32
      %16 = vector.broadcast %cst_14 : f32 to vector<128x16xf32>
      %17 = arith.mulf %16, %15 : vector<128x16xf32>
      %18 = arith.addf %14, %17 : vector<128x16xf32>
      %c0_15 = arith.constant 0 : index
      %c0_16 = arith.constant 0 : index
      %19 = vector.load %arg5[%c0_15, %c0_16] : memref<128x16xf32, #tpu.memory_space<vmem>>, vector<128x16xf32>
      tpu.vector_store %arg5[%c0_15, %c0_16], %18 {strides = array<i32>} : memref<128x16xf32, #tpu.memory_space<vmem>>, vector<128x16xf32>,
    } else {
    }
    return
  }
  func.func @transform_0(%arg0: i32, %arg1: i32) -> (i32, i32) {
    %c0_i32 = arith.constant 0 : i32
    return %arg0, %arg1 : i32, i32
  }
  func.func @transform_1(%arg0: i32, %arg1: i32) -> (i32, i32) {
    %c0_i32 = arith.constant 0 : i32
    %c0_i32_0 = arith.constant 0 : i32
    return %arg1, %c0_i32 : i32, i32
  }
  func.func @transform_2(%arg0: i32, %arg1: i32) -> (i32, i32) {
    %c0_i32 = arith.constant 0 : i32
    %c0_i32_0 = arith.constant 0 : i32
    return %arg0, %c0_i32 : i32, i32
  }
  func.func @transform_3(%arg0: i32, %arg1: i32) -> (i32, i32) {
    %c0_i32 = arith.constant 0 : i32
    %c0_i32_0 = arith.constant 0 : i32
    return %arg0, %c0_i32 : i32, i32
  }
}

module attributes {stable_mosaic.version = 11 : i64} {
  func.func @_cheb_project_kernel(%arg0: i32, %arg1: memref<128x64xf32, #tpu.memory_space<vmem>>, %arg2: memref<64x128xf32, #tpu.memory_space<vmem>>, %arg3: memref<1x128xf32, #tpu.memory_space<vmem>>, %arg4: memref<128x128xf32, #tpu.memory_space<vmem>>) attributes {dimension_semantics = [#tpu.dimension_semantics<parallel>], iteration_bounds = array<i64: 3>, scalar_prefetch = 0 : i64, scratch_operands = 0 : i64, tpu.core_type = #tpu.core_type<tc>, window_params = [{transform_indices = @transform_0, window_bounds = array<i64: 128, 64>}, {pipeline_mode = #tpu.pipeline_mode<synchronous>, transform_indices = @transform_1, window_bounds = array<i64: 64, 128>}, {pipeline_mode = #tpu.pipeline_mode<synchronous>, transform_indices = @transform_2, window_bounds = array<i64: 1, 128>}, {transform_indices = @transform_3, window_bounds = array<i64: 128, 128>}]} {
    %c0 = arith.constant 0 : index
    %c0_0 = arith.constant 0 : index
    %0 = vector.load %arg1[%c0, %c0_0] : memref<128x64xf32, #tpu.memory_space<vmem>>, vector<128x64xf32>
    %c0_1 = arith.constant 0 : index
    %c0_2 = arith.constant 0 : index
    %1 = vector.load %arg2[%c0_1, %c0_2] : memref<64x128xf32, #tpu.memory_space<vmem>>, vector<64x128xf32>
    %cst = arith.constant dense<0.000000e+00> : vector<128x128xf32>
    %2 = tpu.matmul %0, %1, %cst {dimension_numbers = #tpu.dot_dimension_numbers<[1], [0], [0], [1], [0, 0, 1, 1], [], []>} : vector<128x64xf32>, vector<64x128xf32>, vector<128x128xf32> -> vector<128x128xf32>
    %c0_3 = arith.constant 0 : index
    %c0_4 = arith.constant 0 : index
    %3 = vector.load %arg3[%c0_3, %c0_4] : memref<1x128xf32, #tpu.memory_space<vmem>>, vector<1x128xf32>
    %4 = vector.broadcast %3 : vector<1x128xf32> to vector<128x128xf32>
    %5 = arith.addf %2, %4 : vector<128x128xf32>
    %c0_5 = arith.constant 0 : index
    %c0_6 = arith.constant 0 : index
    %6 = vector.load %arg4[%c0_5, %c0_6] : memref<128x128xf32, #tpu.memory_space<vmem>>, vector<128x128xf32>
    tpu.vector_store %arg4[%c0_5, %c0_6], %5 {strides = array<i32>} : memref<128x128xf32, #tpu.memory_space<vmem>>, vector<128x128xf32>,
    return
  }
  func.func @transform_0(%arg0: i32) -> (i32, i32) {
    %c0_i32 = arith.constant 0 : i32
    %c0_i32_0 = arith.constant 0 : i32
    return %arg0, %c0_i32 : i32, i32
  }
  func.func @transform_1(%arg0: i32) -> (i32, i32) {
    %c0_i32 = arith.constant 0 : i32
    %c0_i32_0 = arith.constant 0 : i32
    %c0_i32_1 = arith.constant 0 : i32
    return %c0_i32, %c0_i32_0 : i32, i32
  }
  func.func @transform_2(%arg0: i32) -> (i32, i32) {
    %c0_i32 = arith.constant 0 : i32
    %c0_i32_0 = arith.constant 0 : i32
    %c0_i32_1 = arith.constant 0 : i32
    return %c0_i32, %c0_i32_0 : i32, i32
  }
  func.func @transform_3(%arg0: i32) -> (i32, i32) {
    %c0_i32 = arith.constant 0 : i32
    %c0_i32_0 = arith.constant 0 : i32
    return %arg0, %c0_i32 : i32, i32
  }
}

</mosaic_0001>

<llo_original>
// kernel: cheb_conv_forward.4
$region0: #{cheb_conv_forward.4}
  #allocation0 [shape = 'u32[]', space=smem, size = 0x4, offset = 0x4, fixed_abs, tag = 'smem constant byte address 0x4 - core index']
  #allocation1 [shape = 'u32[144,128]{1,0:T(1,128)}', space=vmem, size = 0x12000, scoped, tag = 'internal scratch']
  #allocation2 [shape = 'f32[128,16]{1,0:T(8,128)}', space=vmem, size = 0x10000, scoped, tag = 'scratch operand']
  %s0 = inlined_call_operand.hbm [shape: f32[384,384], index: 0, kind: input, shape index: {}]
  %s1 = inlined_call_operand.hbm [shape: f32[384,16], index: 1, kind: input, shape index: {}, may-alias: {1,2}]
  %s2 = inlined_call_operand.hbm [shape: f32[384,16], index: 2, kind: input, shape index: {}, may-alias: {1,2}]
  %s3 = inlined_call_operand.hbm [shape: f32[384,16], index: 3, kind: output, shape index: {}]
  %s4 = sld [smem:[#allocation0]]
  $region65: #{cheb_conv_forward.4} parent=0
    _
  %s6 = ssub.s32 1, %s4
  %s7 = scalar_select 0, %s6, %s4
  $region1: #{cheb_conv_forward.4} parent=0
    #allocation3 [shape = 'u8[131072]{0}', space=vmem, size = 0x20000, scoped, tag = 'input window, operand 0']
    #allocation4 [shape = 's32[2]{0}', space=sflag, size = 0x8, scoped, tag = 'scoped memory for cheb_conv_forward.4']
    #allocation5 [shape = 's32[2]{0}', space=sflag, size = 0x8, scoped, tag = 'scoped memory for cheb_conv_forward.4']
    #allocation6 [shape = 'u8[131072]{0}', space=vmem, size = 0x20000, scoped, tag = 'input window, operand 1']
    #allocation7 [shape = 's32[2]{0}', space=sflag, size = 0x8, scoped, tag = 'scoped memory for cheb_conv_forward.4']
    #allocation8 [shape = 'u8[131072]{0}', space=vmem, size = 0x20000, scoped, tag = 'input window, operand 2']
    #allocation9 [shape = 'u8[131072]{0}', space=vmem, size = 0x20000, scoped, tag = 'output window, operand 0']
    %8 = vsyncpa [#allocation4], 0
    %s9 = scalar_lea.sflag [#allocation4], 1
    %10 = vsyncpa %s9, 0
    %11 = vsyncpa [#allocation7], 0
    %s12 = scalar_lea.sflag [#allocation7], 1
    %13 = vsyncpa %s12, 0
    %14 = vsyncpa [#allocation5], 0
    %s15 = scalar_lea.sflag [#allocation5], 1
    %16 = vsyncpa %s15, 0
    loop: start=0, step=1, limit=11
    $region2: #{cheb_conv_forward.4} parent=1 // loop_pre_header
      _
    $region3: #{cheb_conv_forward.4} parent=1 // loop_header
      %s18 = sphi 0, %s22
      %p19 = scmp.ge.s32.totalorder %s18, 11
      %s25 = sphi 0, %s37
      %s26 = sphi 0, %s33
      %s27 = sphi 0, %s25
      %s28 = sphi 0, %s26
      %s29 = sphi 0, %s27
      %s30 = sphi 0, %s28
      %s42 = sphi 0, %s44
      %s45 = sphi 0, %s42
      %s46 = sphi 0, %s45
      %s62 = sphi 0, %s46
      %s68 = sphi 0, %s70
      %s71 = sphi 0, %s68
      %s72 = sphi 0, %s71
      %s88 = sphi 0, %s72
      %s94 = sphi 0, %s96
      %s97 = sphi 0, %s94
      %s98 = sphi 0, %s97
      %s114 = sphi 0, %s98
      %s120 = sphi 0, %s122
      %s123 = sphi 0, %s120
      %s124 = sphi 0, %s123
      %s140 = sphi 0, %s124
    $region4: #{cheb_conv_forward.4} parent=1 // loop_header_branch
      %21 = sbr.rel (%p19) target = $region8
    $region5: #{cheb_conv_forward.4} parent=1 // loop_body
      %s23 = ssub.s32 %s18, 1
      %s24 = ssub.s32 %s18, 2
      %s31 = sadd.s32 1, %s26
      %p32 = scmp.ge.s32.totalorder %s31, 3
      %s33 = scalar_select %p32, 0, %s31
      %s34 = sadd.s32 1, %s25
      %s35 = scalar_select %p32, %s34, %s25
      %p36 = scmp.ge.s32.totalorder %s35, 3
      %s37 = scalar_select %p36, 0, %s35
      %s38 = ssub.s32 %s25, %s37
      %s39 = ssub.s32 %s26, %s33
      %s40 = sor.u32 %s38, %s39
      %p41 = scmp.eq.s32.totalorder %s40, 0
      %s43 = sadd.s32 %s42, 1
      %s44 = scalar_select %p41, %s42, %s43
      %p47 = pneg %p41
      %p48 = scmp.eq.s32.totalorder %s18, 8
      %p49 = por %p47, %p48
      %p50 = scmp.ne.s32.totalorder %s42, %s45
      %p51 = scmp.eq.s32.totalorder %s18, 0
      %p52 = por %p50, %p51
      %p53 = scmp.ne.s32.totalorder %s42, %s45
      %p54 = scmp.eq.s32.totalorder %s23, 8
      %p55 = por %p53, %p54
      %p56 = scmp.ne.s32.totalorder %s45, %s46
      %p57 = scmp.eq.s32.totalorder %s23, 0
      %p58 = por %p56, %p57
      %p59 = scmp.ne.s32.totalorder %s45, %s46
      %p60 = scmp.eq.s32.totalorder %s24, 8
      %p61 = por %p59, %p60
      %p63 = scmp.ne.s32.totalorder %s46, %s62
      %p64 = scmp.eq.s32.totalorder %s24, 0
      %p65 = por %p63, %p64
      %s66 = ssub.s32 %s26, %s33
      %p67 = scmp.eq.s32.totalorder %s66, 0
      %s69 = sadd.s32 %s68, 1
      %s70 = scalar_select %p67, %s68, %s69
      %p73 = pneg %p67
      %p74 = scmp.eq.s32.totalorder %s18, 8
      %p75 = por %p73, %p74
      %p76 = scmp.ne.s32.totalorder %s68, %s71
      %p77 = scmp.eq.s32.totalorder %s18, 0
      %p78 = por %p76, %p77
      %p79 = scmp.ne.s32.totalorder %s68, %s71
      %p80 = scmp.eq.s32.totalorder %s23, 8
      %p81 = por %p79, %p80
      %p82 = scmp.ne.s32.totalorder %s71, %s72
      %p83 = scmp.eq.s32.totalorder %s23, 0
      %p84 = por %p82, %p83
      %p85 = scmp.ne.s32.totalorder %s71, %s72
      %p86 = scmp.eq.s32.totalorder %s24, 8
      %p87 = por %p85, %p86
      %p89 = scmp.ne.s32.totalorder %s72, %s88
      %p90 = scmp.eq.s32.totalorder %s24, 0
      %p91 = por %p89, %p90
      %s92 = ssub.s32 %s25, %s37
      %p93 = scmp.eq.s32.totalorder %s92, 0
      %s95 = sadd.s32 %s94, 1
      %s96 = scalar_select %p93, %s94, %s95
      %p99 = pneg %p93
      %p100 = scmp.eq.s32.totalorder %s18, 8
      %p101 = por %p99, %p100
      %p102 = scmp.ne.s32.totalorder %s94, %s97
      %p103 = scmp.eq.s32.totalorder %s18, 0
      %p104 = por %p102, %p103
      %p105 = scmp.ne.s32.totalorder %s94, %s97
      %p106 = scmp.eq.s32.totalorder %s23, 8
      %p107 = por %p105, %p106
      %p108 = scmp.ne.s32.totalorder %s97, %s98
      %p109 = scmp.eq.s32.totalorder %s23, 0
      %p110 = por %p108, %p109
      %p111 = scmp.ne.s32.totalorder %s97, %s98
      %p112 = scmp.eq.s32.totalorder %s24, 8
      %p113 = por %p111, %p112
      %p115 = scmp.ne.s32.totalorder %s98, %s114
      %p116 = scmp.eq.s32.totalorder %s24, 0
      %p117 = por %p115, %p116
      %s118 = ssub.s32 %s25, %s37
      %p119 = scmp.eq.s32.totalorder %s118, 0
      %s121 = sadd.s32 %s120, 1
      %s122 = scalar_select %p119, %s120, %s121
      %p125 = pneg %p119
      %p126 = scmp.eq.s32.totalorder %s18, 8
      %p127 = por %p125, %p126
      %p128 = scmp.ne.s32.totalorder %s120, %s123
      %p129 = scmp.eq.s32.totalorder %s18, 0
      %p130 = por %p128, %p129
      %p131 = scmp.ne.s32.totalorder %s120, %s123
      %p132 = scmp.eq.s32.totalorder %s23, 8
      %p133 = por %p131, %p132
      %p134 = scmp.ne.s32.totalorder %s123, %s124
      %p135 = scmp.eq.s32.totalorder %s23, 0
      %p136 = por %p134, %p135
      %p137 = scmp.ne.s32.totalorder %s123, %s124
      %p138 = scmp.eq.s32.totalorder %s24, 8
      %p139 = por %p137, %p138
      %p141 = scmp.ne.s32.totalorder %s124, %s140
      %p142 = scmp.eq.s32.totalorder %s24, 0
      %p143 = por %p141, %p142
      %p144 = scmp.le.s32.totalorder 1, %s18
      %p145 = scmp.lt.s32.totalorder %s18, 10
      %p146 = pnand %p144, %p145
      %p147 = pneg %p146
      // Predicated region
      $region9: #{cheb_conv_forward.4} parent=5 // pred_check
        _
      $region10: #{cheb_conv_forward.4} parent=5 // pred_check_branch
        %149 = sbr.rel (%p146) target = $region12
      $region11: #{cheb_conv_forward.4} parent=5 // pred_region
        %s150 = ssub.s32 %s18, 1
      $region12: #{cheb_conv_forward.4} parent=5 // pred_fallthru
        _
      %p151 = scmp.lt.s32.totalorder %s18, 9
      // Predicated region
      $region13: #{cheb_conv_forward.4} parent=5 // pred_check
        %p152 = pneg %p151
      $region14: #{cheb_conv_forward.4} parent=5 // pred_check_branch
        %154 = sbr.rel (%p152) target = $region16
      $region15: #{cheb_conv_forward.4} parent=5 // pred_region
        // Predicated region
        $region17: #{cheb_conv_forward.4} parent=15 // pred_check
          %p155 = pneg %p52
        $region18: #{cheb_conv_forward.4} parent=15 // pred_check_branch
          %157 = sbr.rel (%p155) target = $region20
        $region19: #{cheb_conv_forward.4} parent=15 // pred_region
          %s158 = sand.u32 %s42, 1
          %s159 = scalar_lea.sflag [#allocation4], %s158
          %s160 = sand.u32 %s42, 1
          %s161 = smul.addr %s160, 128
          %s162 = scalar_lea.vmem [#allocation3], %s161
          %s163 = smul.u32 16, %s25
          %s165 = ssub.s32 2048, 2048
          %166 = vsyncadd %s159, %s165
          %s167 = smul.addr %s163, 3
          %s168 = sadd.s32 %s26, %s167
          %s169 = smul.addr %s168, 128
          %s170 = scalar_lea.hbm %s0, %s169
          %s171 = sshll.u32 %s162, 4
          %s172 = int_to_ptr.vmem [resolvable:$true] %s171
          %177 = dma.hbm_to_vmem [thread:$0]  %s170, 2048, %s172, %s159, 384, 128, 8
        $region20: #{cheb_conv_forward.4} parent=15 // pred_fallthru
          _
        // Predicated region
        $region21: #{cheb_conv_forward.4} parent=15 // pred_check
          %p178 = pneg %p78
        $region22: #{cheb_conv_forward.4} parent=15 // pred_check_branch
          %180 = sbr.rel (%p178) target = $region24
        $region23: #{cheb_conv_forward.4} parent=15 // pred_region
          %s181 = sand.u32 %s18, 1
          %s182 = scalar_lea.sflag [#allocation7], %s181
          %s183 = sand.u32 %s68, 1
          %s184 = smul.addr %s183, 128
          %s185 = scalar_lea.vmem [#allocation6], %s184
          %s186 = smul.u32 16, %s26
          %s188 = ssub.s32 2048, 2048
          %189 = vsyncadd %s182, %s188
          %s190 = smul.addr %s186, 128
          %s191 = scalar_lea.hbm %s1, %s190
          %s192 = sshll.u32 %s185, 4
          %s193 = int_to_ptr.vmem [resolvable:$true] %s192
          %198 = dma.hbm_to_vmem [thread:$0]  %s191, 2048, %s193, %s182, 128, 128, 8
        $region24: #{cheb_conv_forward.4} parent=15 // pred_fallthru
          _
        // Predicated region
        $region25: #{cheb_conv_forward.4} parent=15 // pred_check
          %p199 = pneg %p104
        $region26: #{cheb_conv_forward.4} parent=15 // pred_check_branch
          %201 = sbr.rel (%p199) target = $region28
        $region27: #{cheb_conv_forward.4} parent=15 // pred_region
          %s202 = sand.u32 %s18, 1
          %s203 = scalar_lea.sflag [#allocation7], %s202
          %s204 = sand.u32 %s94, 1
          %s205 = smul.addr %s204, 128
          %s206 = scalar_lea.vmem [#allocation8], %s205
          %s207 = smul.u32 16, %s25
          %s209 = ssub.s32 2048, 2048
          %210 = vsyncadd %s203, %s209
          %s211 = smul.addr %s207, 128
          %s212 = scalar_lea.hbm %s2, %s211
          %s213 = sshll.u32 %s206, 4
          %s214 = int_to_ptr.vmem [resolvable:$true] %s213
          %219 = dma.hbm_to_vmem [thread:$0]  %s212, 2048, %s214, %s203, 128, 128, 8
        $region28: #{cheb_conv_forward.4} parent=15 // pred_fallthru
          _
      $region16: #{cheb_conv_forward.4} parent=5 // pred_fallthru
        _
      %p220 = scmp.le.s32.totalorder 1, %s18
      %p221 = scmp.lt.s32.totalorder %s18, 10
      %p222 = pnand %p220, %p221
      %p223 = pneg %p222
      // Predicated region
      $region29: #{cheb_conv_forward.4} parent=5 // pred_check
        _
      $region30: #{cheb_conv_forward.4} parent=5 // pred_check_branch
        %225 = sbr.rel (%p222) target = $region32
      $region31: #{cheb_conv_forward.4} parent=5 // pred_region
        %s226 = ssub.s32 %s18, 1
        %s227 = sand.u32 %s45, 1
        %s228 = scalar_lea.sflag [#allocation4], %s227
        %s229 = sand.u32 %s45, 1
        %s230 = smul.addr %s229, 128
        %s231 = scalar_lea.vmem [#allocation3], %s230
        // Predicated region
        $region33: #{cheb_conv_forward.4} parent=31 // pred_check
          %p232 = pneg %p58
        $region34: #{cheb_conv_forward.4} parent=31 // pred_check_branch
          %234 = sbr.rel (%p232) target = $region36
        $region35: #{cheb_conv_forward.4} parent=31 // pred_region
          %235 = dma.done %s228, 2048
        $region36: #{cheb_conv_forward.4} parent=31 // pred_fallthru
          _
        %s236 = sand.u32 %s23, 1
        %s237 = scalar_lea.sflag [#allocation7], %s236
        %s238 = sand.u32 %s71, 1
        %s239 = smul.addr %s238, 128
        %s240 = scalar_lea.vmem [#allocation6], %s239
        // Predicated region
        $region37: #{cheb_conv_forward.4} parent=31 // pred_check
          %p241 = pneg %p84
        $region38: #{cheb_conv_forward.4} parent=31 // pred_check_branch
          %243 = sbr.rel (%p241) target = $region40
        $region39: #{cheb_conv_forward.4} parent=31 // pred_region
          %244 = dma.done %s237, 2048
        $region40: #{cheb_conv_forward.4} parent=31 // pred_fallthru
          _
        %s245 = sand.u32 %s23, 1
        %s246 = scalar_lea.sflag [#allocation7], %s245
        %s247 = sand.u32 %s97, 1
        %s248 = smul.addr %s247, 128
        %s249 = scalar_lea.vmem [#allocation8], %s248
        // Predicated region
        $region41: #{cheb_conv_forward.4} parent=31 // pred_check
          %p250 = pneg %p110
        $region42: #{cheb_conv_forward.4} parent=31 // pred_check_branch
          %252 = sbr.rel (%p250) target = $region44
        $region43: #{cheb_conv_forward.4} parent=31 // pred_region
          %253 = dma.done %s246, 2048
        $region44: #{cheb_conv_forward.4} parent=31 // pred_fallthru
          _
        %s254 = sand.u32 %s45, 1
        %s255 = scalar_lea.sflag [#allocation4], %s254
        %s256 = sand.u32 %s45, 1
        %s257 = smul.addr %s256, 128
        %s258 = scalar_lea.vmem [#allocation3], %s257
        %p259 = pneg %p58
        %p260 = pneg %p55
        %s261 = sand.u32 %s23, 1
        %s262 = scalar_lea.sflag [#allocation7], %s261
        %s263 = sand.u32 %s71, 1
        %s264 = smul.addr %s263, 128
        %s265 = scalar_lea.vmem [#allocation6], %s264
        %p266 = pneg %p84
        %p267 = pneg %p81
        %s268 = sand.u32 %s23, 1
        %s269 = scalar_lea.sflag [#allocation7], %s268
        %s270 = sand.u32 %s97, 1
        %s271 = smul.addr %s270, 128
        %s272 = scalar_lea.vmem [#allocation8], %s271
        %p273 = pneg %p110
        %p274 = pneg %p107
        %p275 = pneg %p136
        %p276 = pneg %p133
        %s277 = sand.u32 %s123, 1
        %s278 = scalar_lea.sflag [#allocation5], %s277
        %s279 = sand.u32 %s123, 1
        %s280 = smul.addr %s279, 128
        %s281 = scalar_lea.vmem [#allocation9], %s280
        %s282 = smul.u32 16, %s27
        %s283 = smul.u32 16, %s28
        %s284 = smul.u32 16, %s27
        %s285 = smul.u32 16, %s27
        %p286 = scmp.eq.s32.totalorder %s28, 0
        // Predicated region
        $region45: #{cheb_conv_forward.4} parent=31 // pred_check
          %p287 = pneg %p286
        $region46: #{cheb_conv_forward.4} parent=31 // pred_check_branch
          %289 = sbr.rel (%p287) target = $region48
        $region47: #{cheb_conv_forward.4} parent=31 // pred_region
          %vm290 = vcmask 130048
          %291 = vst.msk [vmem:[#allocation2] sm:$0xff] %vm290, 0.0
          %292 = vst.msk [vmem:[#allocation2 + $0x8] sm:$0xff] %vm290, 0.0
          %293 = vst.msk [vmem:[#allocation2 + $0x10] sm:$0xff] %vm290, 0.0
          %294 = vst.msk [vmem:[#allocation2 + $0x18] sm:$0xff] %vm290, 0.0
          %295 = vst.msk [vmem:[#allocation2 + $0x20] sm:$0xff] %vm290, 0.0
          %296 = vst.msk [vmem:[#allocation2 + $0x28] sm:$0xff] %vm290, 0.0
          %297 = vst.msk [vmem:[#allocation2 + $0x30] sm:$0xff] %vm290, 0.0
          %298 = vst.msk [vmem:[#allocation2 + $0x38] sm:$0xff] %vm290, 0.0
          %299 = vst.msk [vmem:[#allocation2 + $0x40] sm:$0xff] %vm290, 0.0
          %300 = vst.msk [vmem:[#allocation2 + $0x48] sm:$0xff] %vm290, 0.0
          %301 = vst.msk [vmem:[#allocation2 + $0x50] sm:$0xff] %vm290, 0.0
          %302 = vst.msk [vmem:[#allocation2 + $0x58] sm:$0xff] %vm290, 0.0
          %303 = vst.msk [vmem:[#allocation2 + $0x60] sm:$0xff] %vm290, 0.0
          %304 = vst.msk [vmem:[#allocation2 + $0x68] sm:$0xff] %vm290, 0.0
          %305 = vst.msk [vmem:[#allocation2 + $0x70] sm:$0xff] %vm290, 0.0
          %306 = vst.msk [vmem:[#allocation2 + $0x78] sm:$0xff] %vm290, 0.0
        $region48: #{cheb_conv_forward.4} parent=31 // pred_fallthru
          _
        %v307 = vld [vmem:[#allocation2] sm:$0xff]
        %v308 = vld [vmem:[#allocation2 + $0x8] sm:$0xff]
        %v309 = vld [vmem:[#allocation2 + $0x10] sm:$0xff]
        %v310 = vld [vmem:[#allocation2 + $0x18] sm:$0xff]
        %v311 = vld [vmem:[#allocation2 + $0x20] sm:$0xff]
        %v312 = vld [vmem:[#allocation2 + $0x28] sm:$0xff]
        %v313 = vld [vmem:[#allocation2 + $0x30] sm:$0xff]
        %v314 = vld [vmem:[#allocation2 + $0x38] sm:$0xff]
        %v315 = vld [vmem:[#allocation2 + $0x40] sm:$0xff]
        %v316 = vld [vmem:[#allocation2 + $0x48] sm:$0xff]
        %v317 = vld [vmem:[#allocation2 + $0x50] sm:$0xff]
        %v318 = vld [vmem:[#allocation2 + $0x58] sm:$0xff]
        %v319 = vld [vmem:[#allocation2 + $0x60] sm:$0xff]
        %v320 = vld [vmem:[#allocation2 + $0x68] sm:$0xff]
        %v321 = vld [vmem:[#allocation2 + $0x70] sm:$0xff]
        %v322 = vld [vmem:[#allocation2 + $0x78] sm:$0xff]
        %v323 = vld [vmem:[%s231] sm:$0xff]
        %v324 = vld [vmem:[%s231 + $0x8] sm:$0xff]
        %v325 = vld [vmem:[%s231 + $0x10] sm:$0xff]
        %v326 = vld [vmem:[%s231 + $0x18] sm:$0xff]
        %v327 = vld [vmem:[%s231 + $0x20] sm:$0xff]
        %v328 = vld [vmem:[%s231 + $0x28] sm:$0xff]
        %v329 = vld [vmem:[%s231 + $0x30] sm:$0xff]
        %v330 = vld [vmem:[%s231 + $0x38] sm:$0xff]
        %v331 = vld [vmem:[%s231 + $0x40] sm:$0xff]
        %v332 = vld [vmem:[%s231 + $0x48] sm:$0xff]
        %v333 = vld [vmem:[%s231 + $0x50] sm:$0xff]
        %v334 = vld [vmem:[%s231 + $0x58] sm:$0xff]
        %v335 = vld [vmem:[%s231 + $0x60] sm:$0xff]
        %v336 = vld [vmem:[%s231 + $0x68] sm:$0xff]
        %v337 = vld [vmem:[%s231 + $0x70] sm:$0xff]
        %v338 = vld [vmem:[%s231 + $0x78] sm:$0xff]
        %v339 = vld [vmem:[%s240] sm:$0xff]
        %v340 = vld [vmem:[%s240 + $0x8] sm:$0xff]
        %v341 = vld [vmem:[%s240 + $0x10] sm:$0xff]
        %v342 = vld [vmem:[%s240 + $0x18] sm:$0xff]
        %v343 = vld [vmem:[%s240 + $0x20] sm:$0xff]
        %v344 = vld [vmem:[%s240 + $0x28] sm:$0xff]
        %v345 = vld [vmem:[%s240 + $0x30] sm:$0xff]
        %v346 = vld [vmem:[%s240 + $0x38] sm:$0xff]
        %v347 = vld [vmem:[%s240 + $0x40] sm:$0xff]
        %v348 = vld [vmem:[%s240 + $0x48] sm:$0xff]
        %v349 = vld [vmem:[%s240 + $0x50] sm:$0xff]
        %v350 = vld [vmem:[%s240 + $0x58] sm:$0xff]
        %v351 = vld [vmem:[%s240 + $0x60] sm:$0xff]
        %v352 = vld [vmem:[%s240 + $0x68] sm:$0xff]
        %v353 = vld [vmem:[%s240 + $0x70] sm:$0xff]
        %v354 = vld [vmem:[%s240 + $0x78] sm:$0xff]
        %355 = vmatprep.subr.mxu0 0.0
        %356 = vmatpush1.msra.mxu0 %v339
        %357 = vmatprep.subr.mxu0 0.0
        %358 = vmatpush1.msra.mxu0 %v340
        %359 = vmatprep.subr.mxu0 0.0
        %360 = vmatpush1.msra.mxu0 %v341
        %361 = vmatprep.subr.mxu0 0.0
        %362 = vmatpush1.msra.mxu0 %v342
        %363 = vmatprep.subr.mxu0 0.0
        %364 = vmatpush1.msra.mxu0 %v343
        %365 = vmatprep.subr.mxu0 0.0
        %366 = vmatpush1.msra.mxu0 %v344
        %367 = vmatprep.subr.mxu0 0.0
        %368 = vmatpush1.msra.mxu0 %v345
        %369 = vmatprep.subr.mxu0 0.0
        %370 = vmatpush1.msra.mxu0 %v346
        %371 = vmatprep.subr.mxu0 0.0
        %372 = vmatpush1.msra.mxu0 %v347
        %373 = vmatprep.subr.mxu0 0.0
        %374 = vmatpush1.msra.mxu0 %v348
        %375 = vmatprep.subr.mxu0 0.0
        %376 = vmatpush1.msra.mxu0 %v349
        %377 = vmatprep.subr.mxu0 0.0
        %378 = vmatpush1.msra.mxu0 %v350
        %379 = vmatprep.subr.mxu0 0.0
        %380 = vmatpush1.msra.mxu0 %v351
        %381 = vmatprep.subr.mxu0 0.0
        %382 = vmatpush1.msra.mxu0 %v352
        %383 = vmatprep.subr.mxu0 0.0
        %384 = vmatpush1.msra.mxu0 %v353
        %385 = vmatprep.subr.mxu0 0.0
        %386 = vmatpush1.msra.mxu0 %v354
        %387 = vmatprep.subr.mxu0 0.0
        %388 = vmatpush1.msra.mxu0 0.0
        %389 = vmatprep.subr.mxu0 0.0
        %390 = vmatpush1.msra.mxu0 0.0
        %391 = vmatprep.subr.mxu0 0.0
        %392 = vmatpush1.msra.mxu0 0.0
        %393 = vmatprep.subr.mxu0 0.0
        %394 = vmatpush1.msra.mxu0 0.0
        %395 = vmatprep.subr.mxu0 0.0
        %396 = vmatpush1.msra.mxu0 0.0
        %397 = vmatprep.subr.mxu0 0.0
        %398 = vmatpush1.msra.mxu0 0.0
        %399 = vmatprep.subr.mxu0 0.0
        %400 = vmatpush1.msra.mxu0 0.0
        %401 = vmatprep.subr.mxu0 0.0
        %402 = vmatpush1.msra.mxu0 0.0
        %403 = vmatprep.subr.mxu0 0.0
        %404 = vmatpush1.msra.mxu0 0.0
        %405 = vmatprep.subr.mxu0 0.0
        %406 = vmatpush1.msra.mxu0 0.0
        %407 = vmatprep.subr.mxu0 0.0
        %408 = vmatpush1.msra.mxu0 0.0
        %409 = vmatprep.subr.mxu0 0.0
        %410 = vmatpush1.msra.mxu0 0.0
        %411 = vmatprep.subr.mxu0 0.0
        %412 = vmatpush1.msra.mxu0 0.0
        %413 = vmatprep.subr.mxu0 0.0
        %414 = vmatpush1.msra.mxu0 0.0
        %415 = vmatprep.subr.mxu0 0.0
        %416 = vmatpush1.msra.mxu0 0.0
        %417 = vmatprep.subr.mxu0 0.0
        %418 = vmatpush1.msra.mxu0 0.0
        %419 = vmatprep.mubr.f32.mxu0 0.0
        %420 = vmatmul.mubr.f32.gmra.mrb[0].mxu0 %v323
        %v421 = vpop.f32.mrb[0].mxu0
        %v422 = vadd.f32 0.0, %v421
        %v423 = vpop.f32.mrb[0].mxu0
        %424 = vmatprep.mubr.f32.mxu0 0.0
        %425 = vmatmul.mubr.f32.gmra.mrb[0].mxu0 %v324
        %v426 = vpop.f32.mrb[0].mxu0
        %v427 = vadd.f32 0.0, %v426
        %v428 = vpop.f32.mrb[0].mxu0
        %429 = vmatprep.mubr.f32.mxu0 0.0
        %430 = vmatmul.mubr.f32.gmra.mrb[0].mxu0 %v325
        %v431 = vpop.f32.mrb[0].mxu0
        %v432 = vadd.f32 0.0, %v431
        %v433 = vpop.f32.mrb[0].mxu0
        %434 = vmatprep.mubr.f32.mxu0 0.0
        %435 = vmatmul.mubr.f32.gmra.mrb[0].mxu0 %v326
        %v436 = vpop.f32.mrb[0].mxu0
        %v437 = vadd.f32 0.0, %v436
        %v438 = vpop.f32.mrb[0].mxu0
        %439 = vmatprep.mubr.f32.mxu0 0.0
        %440 = vmatmul.mubr.f32.gmra.mrb[0].mxu0 %v327
        %v441 = vpop.f32.mrb[0].mxu0
        %v442 = vadd.f32 0.0, %v441
        %v443 = vpop.f32.mrb[0].mxu0
        %444 = vmatprep.mubr.f32.mxu0 0.0
        %445 = vmatmul.mubr.f32.gmra.mrb[0].mxu0 %v328
        %v446 = vpop.f32.mrb[0].mxu0
        %v447 = vadd.f32 0.0, %v446
        %v448 = vpop.f32.mrb[0].mxu0
        %449 = vmatprep.mubr.f32.mxu0 0.0
        %450 = vmatmul.mubr.f32.gmra.mrb[0].mxu0 %v329
        %v451 = vpop.f32.mrb[0].mxu0
        %v452 = vadd.f32 0.0, %v451
        %v453 = vpop.f32.mrb[0].mxu0
        %454 = vmatprep.mubr.f32.mxu0 0.0
        %455 = vmatmul.mubr.f32.gmra.mrb[0].mxu0 %v330
        %v456 = vpop.f32.mrb[0].mxu0
        %v457 = vadd.f32 0.0, %v456
        %v458 = vpop.f32.mrb[0].mxu0
        %459 = vmatprep.mubr.f32.mxu0 0.0
        %460 = vmatmul.mubr.f32.gmra.mrb[0].mxu0 %v331
        %v461 = vpop.f32.mrb[0].mxu0
        %v462 = vadd.f32 0.0, %v461
        %v463 = vpop.f32.mrb[0].mxu0
        %464 = vmatprep.mubr.f32.mxu0 0.0
        %465 = vmatmul.mubr.f32.gmra.mrb[0].mxu0 %v332
        %v466 = vpop.f32.mrb[0].mxu0
        %v467 = vadd.f32 0.0, %v466
        %v468 = vpop.f32.mrb[0].mxu0
        %469 = vmatprep.mubr.f32.mxu0 0.0
        %470 = vmatmul.mubr.f32.gmra.mrb[0].mxu0 %v333
        %v471 = vpop.f32.mrb[0].mxu0
        %v472 = vadd.f32 0.0, %v471
        %v473 = vpop.f32.mrb[0].mxu0
        %474 = vmatprep.mubr.f32.mxu0 0.0
        %475 = vmatmul.mubr.f32.gmra.mrb[0].mxu0 %v334
        %v476 = vpop.f32.mrb[0].mxu0
        %v477 = vadd.f32 0.0, %v476
        %v478 = vpop.f32.mrb[0].mxu0
        %479 = vmatprep.mubr.f32.mxu0 0.0
        %480 = vmatmul.mubr.f32.gmra.mrb[0].mxu0 %v335
        %v481 = vpop.f32.mrb[0].mxu0
        %v482 = vadd.f32 0.0, %v481
        %v483 = vpop.f32.mrb[0].mxu0
        %484 = vmatprep.mubr.f32.mxu0 0.0
        %485 = vmatmul.mubr.f32.gmra.mrb[0].mxu0 %v336
        %v486 = vpop.f32.mrb[0].mxu0
        %v487 = vadd.f32 0.0, %v486
        %v488 = vpop.f32.mrb[0].mxu0
        %489 = vmatprep.mubr.f32.mxu0 0.0
        %490 = vmatmul.mubr.f32.gmra.mrb[0].mxu0 %v337
        %v491 = vpop.f32.mrb[0].mxu0
        %v492 = vadd.f32 0.0, %v491
        %v493 = vpop.f32.mrb[0].mxu0
        %494 = vmatprep.mubr.f32.mxu0 0.0
        %495 = vmatmul.mubr.f32.gmra.mrb[0].mxu0 %v338
        %v496 = vpop.f32.mrb[0].mxu0
        %v497 = vadd.f32 0.0, %v496
        %v498 = vpop.f32.mrb[0].mxu0
        %499 = vdwg.mxu0
        %v500 = vadd.f32 %v307, %v422
        %v501 = vadd.f32 %v308, %v427
        %v502 = vadd.f32 %v309, %v432
        %v503 = vadd.f32 %v310, %v437
        %v504 = vadd.f32 %v311, %v442
        %v505 = vadd.f32 %v312, %v447
        %v506 = vadd.f32 %v313, %v452
        %v507 = vadd.f32 %v314, %v457
        %v508 = vadd.f32 %v315, %v462
        %v509 = vadd.f32 %v316, %v467
        %v510 = vadd.f32 %v317, %v472
        %v511 = vadd.f32 %v318, %v477
        %v512 = vadd.f32 %v319, %v482
        %v513 = vadd.f32 %v320, %v487
        %v514 = vadd.f32 %v321, %v492
        %v515 = vadd.f32 %v322, %v497
        %vm516 = vcmask 130048
        %517 = vst.msk [vmem:[#allocation2] sm:$0xff] %vm516, %v500
        %518 = vst.msk [vmem:[#allocation2 + $0x8] sm:$0xff] %vm516, %v501
        %519 = vst.msk [vmem:[#allocation2 + $0x10] sm:$0xff] %vm516, %v502
        %520 = vst.msk [vmem:[#allocation2 + $0x18] sm:$0xff] %vm516, %v503
        %521 = vst.msk [vmem:[#allocation2 + $0x20] sm:$0xff] %vm516, %v504
        %522 = vst.msk [vmem:[#allocation2 + $0x28] sm:$0xff] %vm516, %v505
        %523 = vst.msk [vmem:[#allocation2 + $0x30] sm:$0xff] %vm516, %v506
        %524 = vst.msk [vmem:[#allocation2 + $0x38] sm:$0xff] %vm516, %v507
        %525 = vst.msk [vmem:[#allocation2 + $0x40] sm:$0xff] %vm516, %v508
        %526 = vst.msk [vmem:[#allocation2 + $0x48] sm:$0xff] %vm516, %v509
        %527 = vst.msk [vmem:[#allocation2 + $0x50] sm:$0xff] %vm516, %v510
        %528 = vst.msk [vmem:[#allocation2 + $0x58] sm:$0xff] %vm516, %v511
        %529 = vst.msk [vmem:[#allocation2 + $0x60] sm:$0xff] %vm516, %v512
        %530 = vst.msk [vmem:[#allocation2 + $0x68] sm:$0xff] %vm516, %v513
        %531 = vst.msk [vmem:[#allocation2 + $0x70] sm:$0xff] %vm516, %v514
        %532 = vst.msk [vmem:[#allocation2 + $0x78] sm:$0xff] %vm516, %v515
        %p533 = scmp.eq.s32.totalorder %s28, 2
        // Predicated region
        $region49: #{cheb_conv_forward.4} parent=31 // pred_check
          %p534 = pneg %p533
        $region50: #{cheb_conv_forward.4} parent=31 // pred_check_branch
          %536 = sbr.rel (%p534) target = $region52
        $region51: #{cheb_conv_forward.4} parent=31 // pred_region
          %v537 = vld [vmem:[#allocation2] sm:$0xff]
          %v538 = vld [vmem:[#allocation2 + $0x8] sm:$0xff]
          %v539 = vld [vmem:[#allocation2 + $0x10] sm:$0xff]
          %v540 = vld [vmem:[#allocation2 + $0x18] sm:$0xff]
          %v541 = vld [vmem:[#allocation2 + $0x20] sm:$0xff]
          %v542 = vld [vmem:[#allocation2 + $0x28] sm:$0xff]
          %v543 = vld [vmem:[#allocation2 + $0x30] sm:$0xff]
          %v544 = vld [vmem:[#allocation2 + $0x38] sm:$0xff]
          %v545 = vld [vmem:[#allocation2 + $0x40] sm:$0xff]
          %v546 = vld [vmem:[#allocation2 + $0x48] sm:$0xff]
          %v547 = vld [vmem:[#allocation2 + $0x50] sm:$0xff]
          %v548 = vld [vmem:[#allocation2 + $0x58] sm:$0xff]
          %v549 = vld [vmem:[#allocation2 + $0x60] sm:$0xff]
          %v550 = vld [vmem:[#allocation2 + $0x68] sm:$0xff]
          %v551 = vld [vmem:[#allocation2 + $0x70] sm:$0xff]
          %v552 = vld [vmem:[#allocation2 + $0x78] sm:$0xff]
          %553 = vst.msk [vmem:[%s281] sm:$0xff] %vm516, %v537
          %554 = vst.msk [vmem:[%s281 + $0x8] sm:$0xff] %vm516, %v538
          %555 = vst.msk [vmem:[%s281 + $0x10] sm:$0xff] %vm516, %v539
          %556 = vst.msk [vmem:[%s281 + $0x18] sm:$0xff] %vm516, %v540
          %557 = vst.msk [vmem:[%s281 + $0x20] sm:$0xff] %vm516, %v541
          %558 = vst.msk [vmem:[%s281 + $0x28] sm:$0xff] %vm516, %v542
          %559 = vst.msk [vmem:[%s281 + $0x30] sm:$0xff] %vm516, %v543
          %560 = vst.msk [vmem:[%s281 + $0x38] sm:$0xff] %vm516, %v544
          %561 = vst.msk [vmem:[%s281 + $0x40] sm:$0xff] %vm516, %v545
          %562 = vst.msk [vmem:[%s281 + $0x48] sm:$0xff] %vm516, %v546
          %563 = vst.msk [vmem:[%s281 + $0x50] sm:$0xff] %vm516, %v547
          %564 = vst.msk [vmem:[%s281 + $0x58] sm:$0xff] %vm516, %v548
          %565 = vst.msk [vmem:[%s281 + $0x60] sm:$0xff] %vm516, %v549
          %566 = vst.msk [vmem:[%s281 + $0x68] sm:$0xff] %vm516, %v550
          %567 = vst.msk [vmem:[%s281 + $0x70] sm:$0xff] %vm516, %v551
          %568 = vst.msk [vmem:[%s281 + $0x78] sm:$0xff] %vm516, %v552
        $region52: #{cheb_conv_forward.4} parent=31 // pred_fallthru
          _
        %s569 = sand.u32 %s123, 1
        %s570 = scalar_lea.sflag [#allocation5], %s569
        %s571 = sand.u32 %s123, 1
        %s572 = smul.addr %s571, 128
        %s573 = scalar_lea.vmem [#allocation9], %s572
        // Predicated region
        $region53: #{cheb_conv_forward.4} parent=31 // pred_check
          %p574 = pneg %p133
        $region54: #{cheb_conv_forward.4} parent=31 // pred_check_branch
          %576 = sbr.rel (%p574) target = $region56
        $region55: #{cheb_conv_forward.4} parent=31 // pred_region
          %s577 = smul.u32 16, %s27
          %s579 = ssub.s32 2048, 2048
          %580 = vsyncadd %s570, %s579
          %s581 = smul.addr %s577, 128
          %s582 = scalar_lea.hbm %s3, %s581
          %s583 = sshll.u32 %s573, 4
          %s584 = int_to_ptr.vmem [resolvable:$true] %s583
          %589 = dma.vmem_to_hbm [thread:$0]  %s584, 2048, %s582, %s570, 128, 128, 8
        $region56: #{cheb_conv_forward.4} parent=31 // pred_fallthru
          _
      $region32: #{cheb_conv_forward.4} parent=5 // pred_fallthru
        _
      %p590 = scmp.le.s32.totalorder 2, %s18
      // Predicated region
      $region57: #{cheb_conv_forward.4} parent=5 // pred_check
        %p591 = pneg %p590
      $region58: #{cheb_conv_forward.4} parent=5 // pred_check_branch
        %593 = sbr.rel (%p591) target = $region60
      $region59: #{cheb_conv_forward.4} parent=5 // pred_region
        %s594 = ssub.s32 %s18, 2
        // Predicated region
        $region61: #{cheb_conv_forward.4} parent=59 // pred_check
          %p595 = pneg %p139
        $region62: #{cheb_conv_forward.4} parent=59 // pred_check_branch
          %597 = sbr.rel (%p595) target = $region64
        $region63: #{cheb_conv_forward.4} parent=59 // pred_region
          %s598 = sand.u32 %s124, 1
          %s599 = scalar_lea.sflag [#allocation5], %s598
          %s600 = sand.u32 %s124, 1
          %s601 = smul.addr %s600, 128
          %s602 = scalar_lea.vmem [#allocation9], %s601
          %603 = dma.done %s599, 2048
        $region64: #{cheb_conv_forward.4} parent=59 // pred_fallthru
          _
      $region60: #{cheb_conv_forward.4} parent=5 // pred_fallthru
        _
    $region6: #{cheb_conv_forward.4} parent=1 // loop_footer
      %s22 = sadd.s32 1, %s18
    $region7: #{cheb_conv_forward.4} parent=1 // loop_footer_branch
      %17 = sbr.rel target = $region3
    $region8: #{cheb_conv_forward.4} parent=1 // loop_exit
      _
    %604 = vsyncpa [#allocation4], 1
    %s605 = scalar_lea.sflag [#allocation4], 1
    %606 = vsyncpa %s605, 1
    %607 = vsyncpa [#allocation7], 1
    %s608 = scalar_lea.sflag [#allocation7], 1
    %609 = vsyncpa %s608, 1
    %610 = vsyncpa [#allocation5], 1
    %s611 = scalar_lea.sflag [#allocation5], 1
    %612 = vsyncpa %s611, 1

// kernel: cheb_conv_forward.5
$region0: #{cheb_conv_forward.5}
  #allocation0 [shape = 'u32[]', space=smem, size = 0x4, offset = 0x4, fixed_abs, tag = 'smem constant byte address 0x4 - core index']
  #allocation1 [shape = 'u32[144,128]{1,0:T(1,128)}', space=vmem, size = 0x12000, scoped, tag = 'internal scratch']
  #allocation2 [shape = 'f32[128,16]{1,0:T(8,128)}', space=vmem, size = 0x10000, scoped, tag = 'scratch operand']
  %s0 = inlined_call_operand.hbm [shape: f32[384,384], index: 0, kind: input, shape index: {}]
  %s1 = inlined_call_operand.hbm [shape: f32[384,16], index: 1, kind: input, shape index: {}]
  %s2 = inlined_call_operand.hbm [shape: f32[384,16], index: 2, kind: input, shape index: {}]
  %s3 = inlined_call_operand.hbm [shape: f32[384,16], index: 3, kind: output, shape index: {}]
  %s4 = sld [smem:[#allocation0]]
  $region65: #{cheb_conv_forward.5} parent=0
    _
  %s6 = ssub.s32 1, %s4
  %s7 = scalar_select 0, %s6, %s4
  $region1: #{cheb_conv_forward.5} parent=0
    #allocation3 [shape = 'u8[131072]{0}', space=vmem, size = 0x20000, scoped, tag = 'input window, operand 0']
    #allocation4 [shape = 's32[2]{0}', space=sflag, size = 0x8, scoped, tag = 'scoped memory for cheb_conv_forward.5']
    #allocation5 [shape = 's32[2]{0}', space=sflag, size = 0x8, scoped, tag = 'scoped memory for cheb_conv_forward.5']
    #allocation6 [shape = 'u8[131072]{0}', space=vmem, size = 0x20000, scoped, tag = 'input window, operand 1']
    #allocation7 [shape = 's32[2]{0}', space=sflag, size = 0x8, scoped, tag = 'scoped memory for cheb_conv_forward.5']
    #allocation8 [shape = 'u8[131072]{0}', space=vmem, size = 0x20000, scoped, tag = 'input window, operand 2']
    #allocation9 [shape = 'u8[131072]{0}', space=vmem, size = 0x20000, scoped, tag = 'output window, operand 0']
    %8 = vsyncpa [#allocation4], 0
    %s9 = scalar_lea.sflag [#allocation4], 1
    %10 = vsyncpa %s9, 0
    %11 = vsyncpa [#allocation7], 0
    %s12 = scalar_lea.sflag [#allocation7], 1
    %13 = vsyncpa %s12, 0
    %14 = vsyncpa [#allocation5], 0
    %s15 = scalar_lea.sflag [#allocation5], 1
    %16 = vsyncpa %s15, 0
    loop: start=0, step=1, limit=11
    $region2: #{cheb_conv_forward.5} parent=1 // loop_pre_header
      _
    $region3: #{cheb_conv_forward.5} parent=1 // loop_header
      %s18 = sphi 0, %s22
      %p19 = scmp.ge.s32.totalorder %s18, 11
      %s25 = sphi 0, %s37
      %s26 = sphi 0, %s33
      %s27 = sphi 0, %s25
      %s28 = sphi 0, %s26
      %s29 = sphi 0, %s27
      %s30 = sphi 0, %s28
      %s42 = sphi 0, %s44
      %s45 = sphi 0, %s42
      %s46 = sphi 0, %s45
      %s62 = sphi 0, %s46
      %s68 = sphi 0, %s70
      %s71 = sphi 0, %s68
      %s72 = sphi 0, %s71
      %s88 = sphi 0, %s72
      %s94 = sphi 0, %s96
      %s97 = sphi 0, %s94
      %s98 = sphi 0, %s97
      %s114 = sphi 0, %s98
      %s120 = sphi 0, %s122
      %s123 = sphi 0, %s120
      %s124 = sphi 0, %s123
      %s140 = sphi 0, %s124
    $region4: #{cheb_conv_forward.5} parent=1 // loop_header_branch
      %21 = sbr.rel (%p19) target = $region8
    $region5: #{cheb_conv_forward.5} parent=1 // loop_body
      %s23 = ssub.s32 %s18, 1
      %s24 = ssub.s32 %s18, 2
      %s31 = sadd.s32 1, %s26
      %p32 = scmp.ge.s32.totalorder %s31, 3
      %s33 = scalar_select %p32, 0, %s31
      %s34 = sadd.s32 1, %s25
      %s35 = scalar_select %p32, %s34, %s25
      %p36 = scmp.ge.s32.totalorder %s35, 3
      %s37 = scalar_select %p36, 0, %s35
      %s38 = ssub.s32 %s25, %s37
      %s39 = ssub.s32 %s26, %s33
      %s40 = sor.u32 %s38, %s39
      %p41 = scmp.eq.s32.totalorder %s40, 0
      %s43 = sadd.s32 %s42, 1
      %s44 = scalar_select %p41, %s42, %s43
      %p47 = pneg %p41
      %p48 = scmp.eq.s32.totalorder %s18, 8
      %p49 = por %p47, %p48
      %p50 = scmp.ne.s32.totalorder %s42, %s45
      %p51 = scmp.eq.s32.totalorder %s18, 0
      %p52 = por %p50, %p51
      %p53 = scmp.ne.s32.totalorder %s42, %s45
      %p54 = scmp.eq.s32.totalorder %s23, 8
      %p55 = por %p53, %p54
      %p56 = scmp.ne.s32.totalorder %s45, %s46
      %p57 = scmp.eq.s32.totalorder %s23, 0
      %p58 = por %p56, %p57
      %p59 = scmp.ne.s32.totalorder %s45, %s46
      %p60 = scmp.eq.s32.totalorder %s24, 8
      %p61 = por %p59, %p60
      %p63 = scmp.ne.s32.totalorder %s46, %s62
      %p64 = scmp.eq.s32.totalorder %s24, 0
      %p65 = por %p63, %p64
      %s66 = ssub.s32 %s26, %s33
      %p67 = scmp.eq.s32.totalorder %s66, 0
      %s69 = sadd.s32 %s68, 1
      %s70 = scalar_select %p67, %s68, %s69
      %p73 = pneg %p67
      %p74 = scmp.eq.s32.totalorder %s18, 8
      %p75 = por %p73, %p74
      %p76 = scmp.ne.s32.totalorder %s68, %s71
      %p77 = scmp.eq.s32.totalorder %s18, 0
      %p78 = por %p76, %p77
      %p79 = scmp.ne.s32.totalorder %s68, %s71
      %p80 = scmp.eq.s32.totalorder %s23, 8
      %p81 = por %p79, %p80
      %p82 = scmp.ne.s32.totalorder %s71, %s72
      %p83 = scmp.eq.s32.totalorder %s23, 0
      %p84 = por %p82, %p83
      %p85 = scmp.ne.s32.totalorder %s71, %s72
      %p86 = scmp.eq.s32.totalorder %s24, 8
      %p87 = por %p85, %p86
      %p89 = scmp.ne.s32.totalorder %s72, %s88
      %p90 = scmp.eq.s32.totalorder %s24, 0
      %p91 = por %p89, %p90
      %s92 = ssub.s32 %s25, %s37
      %p93 = scmp.eq.s32.totalorder %s92, 0
      %s95 = sadd.s32 %s94, 1
      %s96 = scalar_select %p93, %s94, %s95
      %p99 = pneg %p93
      %p100 = scmp.eq.s32.totalorder %s18, 8
      %p101 = por %p99, %p100
      %p102 = scmp.ne.s32.totalorder %s94, %s97
      %p103 = scmp.eq.s32.totalorder %s18, 0
      %p104 = por %p102, %p103
      %p105 = scmp.ne.s32.totalorder %s94, %s97
      %p106 = scmp.eq.s32.totalorder %s23, 8
      %p107 = por %p105, %p106
      %p108 = scmp.ne.s32.totalorder %s97, %s98
      %p109 = scmp.eq.s32.totalorder %s23, 0
      %p110 = por %p108, %p109
      %p111 = scmp.ne.s32.totalorder %s97, %s98
      %p112 = scmp.eq.s32.totalorder %s24, 8
      %p113 = por %p111, %p112
      %p115 = scmp.ne.s32.totalorder %s98, %s114
      %p116 = scmp.eq.s32.totalorder %s24, 0
      %p117 = por %p115, %p116
      %s118 = ssub.s32 %s25, %s37
      %p119 = scmp.eq.s32.totalorder %s118, 0
      %s121 = sadd.s32 %s120, 1
      %s122 = scalar_select %p119, %s120, %s121
      %p125 = pneg %p119
      %p126 = scmp.eq.s32.totalorder %s18, 8
      %p127 = por %p125, %p126
      %p128 = scmp.ne.s32.totalorder %s120, %s123
      %p129 = scmp.eq.s32.totalorder %s18, 0
      %p130 = por %p128, %p129
      %p131 = scmp.ne.s32.totalorder %s120, %s123
      %p132 = scmp.eq.s32.totalorder %s23, 8
      %p133 = por %p131, %p132
      %p134 = scmp.ne.s32.totalorder %s123, %s124
      %p135 = scmp.eq.s32.totalorder %s23, 0
      %p136 = por %p134, %p135
      %p137 = scmp.ne.s32.totalorder %s123, %s124
      %p138 = scmp.eq.s32.totalorder %s24, 8
      %p139 = por %p137, %p138
      %p141 = scmp.ne.s32.totalorder %s124, %s140
      %p142 = scmp.eq.s32.totalorder %s24, 0
      %p143 = por %p141, %p142
      %p144 = scmp.le.s32.totalorder 1, %s18
      %p145 = scmp.lt.s32.totalorder %s18, 10
      %p146 = pnand %p144, %p145
      %p147 = pneg %p146
      // Predicated region
      $region9: #{cheb_conv_forward.5} parent=5 // pred_check
        _
      $region10: #{cheb_conv_forward.5} parent=5 // pred_check_branch
        %149 = sbr.rel (%p146) target = $region12
      $region11: #{cheb_conv_forward.5} parent=5 // pred_region
        %s150 = ssub.s32 %s18, 1
      $region12: #{cheb_conv_forward.5} parent=5 // pred_fallthru
        _
      %p151 = scmp.lt.s32.totalorder %s18, 9
      // Predicated region
      $region13: #{cheb_conv_forward.5} parent=5 // pred_check
        %p152 = pneg %p151
      $region14: #{cheb_conv_forward.5} parent=5 // pred_check_branch
        %154 = sbr.rel (%p152) target = $region16
      $region15: #{cheb_conv_forward.5} parent=5 // pred_region
        // Predicated region
        $region17: #{cheb_conv_forward.5} parent=15 // pred_check
          %p155 = pneg %p52
        $region18: #{cheb_conv_forward.5} parent=15 // pred_check_branch
          %157 = sbr.rel (%p155) target = $region20
        $region19: #{cheb_conv_forward.5} parent=15 // pred_region
          %s158 = sand.u32 %s42, 1
          %s159 = scalar_lea.sflag [#allocation4], %s158
          %s160 = sand.u32 %s42, 1
          %s161 = smul.addr %s160, 128
          %s162 = scalar_lea.vmem [#allocation3], %s161
          %s163 = smul.u32 16, %s25
          %s165 = ssub.s32 2048, 2048
          %166 = vsyncadd %s159, %s165
          %s167 = smul.addr %s163, 3
          %s168 = sadd.s32 %s26, %s167
          %s169 = smul.addr %s168, 128
          %s170 = scalar_lea.hbm %s0, %s169
          %s171 = sshll.u32 %s162, 4
          %s172 = int_to_ptr.vmem [resolvable:$true] %s171
          %177 = dma.hbm_to_vmem [thread:$0]  %s170, 2048, %s172, %s159, 384, 128, 8
        $region20: #{cheb_conv_forward.5} parent=15 // pred_fallthru
          _
        // Predicated region
        $region21: #{cheb_conv_forward.5} parent=15 // pred_check
          %p178 = pneg %p78
        $region22: #{cheb_conv_forward.5} parent=15 // pred_check_branch
          %180 = sbr.rel (%p178) target = $region24
        $region23: #{cheb_conv_forward.5} parent=15 // pred_region
          %s181 = sand.u32 %s18, 1
          %s182 = scalar_lea.sflag [#allocation7], %s181
          %s183 = sand.u32 %s68, 1
          %s184 = smul.addr %s183, 128
          %s185 = scalar_lea.vmem [#allocation6], %s184
          %s186 = smul.u32 16, %s26
          %s188 = ssub.s32 2048, 2048
          %189 = vsyncadd %s182, %s188
          %s190 = smul.addr %s186, 128
          %s191 = scalar_lea.hbm %s1, %s190
          %s192 = sshll.u32 %s185, 4
          %s193 = int_to_ptr.vmem [resolvable:$true] %s192
          %198 = dma.hbm_to_vmem [thread:$0]  %s191, 2048, %s193, %s182, 128, 128, 8
        $region24: #{cheb_conv_forward.5} parent=15 // pred_fallthru
          _
        // Predicated region
        $region25: #{cheb_conv_forward.5} parent=15 // pred_check
          %p199 = pneg %p104
        $region26: #{cheb_conv_forward.5} parent=15 // pred_check_branch
          %201 = sbr.rel (%p199) target = $region28
        $region27: #{cheb_conv_forward.5} parent=15 // pred_region
          %s202 = sand.u32 %s18, 1
          %s203 = scalar_lea.sflag [#allocation7], %s202
          %s204 = sand.u32 %s94, 1
          %s205 = smul.addr %s204, 128
          %s206 = scalar_lea.vmem [#allocation8], %s205
          %s207 = smul.u32 16, %s25
          %s209 = ssub.s32 2048, 2048
          %210 = vsyncadd %s203, %s209
          %s211 = smul.addr %s207, 128
          %s212 = scalar_lea.hbm %s2, %s211
          %s213 = sshll.u32 %s206, 4
          %s214 = int_to_ptr.vmem [resolvable:$true] %s213
          %219 = dma.hbm_to_vmem [thread:$0]  %s212, 2048, %s214, %s203, 128, 128, 8
        $region28: #{cheb_conv_forward.5} parent=15 // pred_fallthru
          _
      $region16: #{cheb_conv_forward.5} parent=5 // pred_fallthru
        _
      %p220 = scmp.le.s32.totalorder 1, %s18
      %p221 = scmp.lt.s32.totalorder %s18, 10
      %p222 = pnand %p220, %p221
      %p223 = pneg %p222
      // Predicated region
      $region29: #{cheb_conv_forward.5} parent=5 // pred_check
        _
      $region30: #{cheb_conv_forward.5} parent=5 // pred_check_branch
        %225 = sbr.rel (%p222) target = $region32
      $region31: #{cheb_conv_forward.5} parent=5 // pred_region
        %s226 = ssub.s32 %s18, 1
        %s227 = sand.u32 %s45, 1
        %s228 = scalar_lea.sflag [#allocation4], %s227
        %s229 = sand.u32 %s45, 1
        %s230 = smul.addr %s229, 128
        %s231 = scalar_lea.vmem [#allocation3], %s230
        // Predicated region
        $region33: #{cheb_conv_forward.5} parent=31 // pred_check
          %p232 = pneg %p58
        $region34: #{cheb_conv_forward.5} parent=31 // pred_check_branch
          %234 = sbr.rel (%p232) target = $region36
        $region35: #{cheb_conv_forward.5} parent=31 // pred_region
          %235 = dma.done %s228, 2048
        $region36: #{cheb_conv_forward.5} parent=31 // pred_fallthru
          _
        %s236 = sand.u32 %s23, 1
        %s237 = scalar_lea.sflag [#allocation7], %s236
        %s238 = sand.u32 %s71, 1
        %s239 = smul.addr %s238, 128
        %s240 = scalar_lea.vmem [#allocation6], %s239
        // Predicated region
        $region37: #{cheb_conv_forward.5} parent=31 // pred_check
          %p241 = pneg %p84
        $region38: #{cheb_conv_forward.5} parent=31 // pred_check_branch
          %243 = sbr.rel (%p241) target = $region40
        $region39: #{cheb_conv_forward.5} parent=31 // pred_region
          %244 = dma.done %s237, 2048
        $region40: #{cheb_conv_forward.5} parent=31 // pred_fallthru
          _
        %s245 = sand.u32 %s23, 1
        %s246 = scalar_lea.sflag [#allocation7], %s245
        %s247 = sand.u32 %s97, 1
        %s248 = smul.addr %s247, 128
        %s249 = scalar_lea.vmem [#allocation8], %s248
        // Predicated region
        $region41: #{cheb_conv_forward.5} parent=31 // pred_check
          %p250 = pneg %p110
        $region42: #{cheb_conv_forward.5} parent=31 // pred_check_branch
          %252 = sbr.rel (%p250) target = $region44
        $region43: #{cheb_conv_forward.5} parent=31 // pred_region
          %253 = dma.done %s246, 2048
        $region44: #{cheb_conv_forward.5} parent=31 // pred_fallthru
          _
        %s254 = sand.u32 %s45, 1
        %s255 = scalar_lea.sflag [#allocation4], %s254
        %s256 = sand.u32 %s45, 1
        %s257 = smul.addr %s256, 128
        %s258 = scalar_lea.vmem [#allocation3], %s257
        %p259 = pneg %p58
        %p260 = pneg %p55
        %s261 = sand.u32 %s23, 1
        %s262 = scalar_lea.sflag [#allocation7], %s261
        %s263 = sand.u32 %s71, 1
        %s264 = smul.addr %s263, 128
        %s265 = scalar_lea.vmem [#allocation6], %s264
        %p266 = pneg %p84
        %p267 = pneg %p81
        %s268 = sand.u32 %s23, 1
        %s269 = scalar_lea.sflag [#allocation7], %s268
        %s270 = sand.u32 %s97, 1
        %s271 = smul.addr %s270, 128
        %s272 = scalar_lea.vmem [#allocation8], %s271
        %p273 = pneg %p110
        %p274 = pneg %p107
        %p275 = pneg %p136
        %p276 = pneg %p133
        %s277 = sand.u32 %s123, 1
        %s278 = scalar_lea.sflag [#allocation5], %s277
        %s279 = sand.u32 %s123, 1
        %s280 = smul.addr %s279, 128
        %s281 = scalar_lea.vmem [#allocation9], %s280
        %s282 = smul.u32 16, %s27
        %s283 = smul.u32 16, %s28
        %s284 = smul.u32 16, %s27
        %s285 = smul.u32 16, %s27
        %p286 = scmp.eq.s32.totalorder %s28, 0
        // Predicated region
        $region45: #{cheb_conv_forward.5} parent=31 // pred_check
          %p287 = pneg %p286
        $region46: #{cheb_conv_forward.5} parent=31 // pred_check_branch
          %289 = sbr.rel (%p287) target = $region48
        $region47: #{cheb_conv_forward.5} parent=31 // pred_region
          %vm290 = vcmask 130048
          %291 = vst.msk [vmem:[#allocation2] sm:$0xff] %vm290, 0.0
          %292 = vst.msk [vmem:[#allocation2 + $0x8] sm:$0xff] %vm290, 0.0
          %293 = vst.msk [vmem:[#allocation2 + $0x10] sm:$0xff] %vm290, 0.0
          %294 = vst.msk [vmem:[#allocation2 + $0x18] sm:$0xff] %vm290, 0.0
          %295 = vst.msk [vmem:[#allocation2 + $0x20] sm:$0xff] %vm290, 0.0
          %296 = vst.msk [vmem:[#allocation2 + $0x28] sm:$0xff] %vm290, 0.0
          %297 = vst.msk [vmem:[#allocation2 + $0x30] sm:$0xff] %vm290, 0.0
          %298 = vst.msk [vmem:[#allocation2 + $0x38] sm:$0xff] %vm290, 0.0
          %299 = vst.msk [vmem:[#allocation2 + $0x40] sm:$0xff] %vm290, 0.0
          %300 = vst.msk [vmem:[#allocation2 + $0x48] sm:$0xff] %vm290, 0.0
          %301 = vst.msk [vmem:[#allocation2 + $0x50] sm:$0xff] %vm290, 0.0
          %302 = vst.msk [vmem:[#allocation2 + $0x58] sm:$0xff] %vm290, 0.0
          %303 = vst.msk [vmem:[#allocation2 + $0x60] sm:$0xff] %vm290, 0.0
          %304 = vst.msk [vmem:[#allocation2 + $0x68] sm:$0xff] %vm290, 0.0
          %305 = vst.msk [vmem:[#allocation2 + $0x70] sm:$0xff] %vm290, 0.0
          %306 = vst.msk [vmem:[#allocation2 + $0x78] sm:$0xff] %vm290, 0.0
        $region48: #{cheb_conv_forward.5} parent=31 // pred_fallthru
          _
        %v307 = vld [vmem:[#allocation2] sm:$0xff]
        %v308 = vld [vmem:[#allocation2 + $0x8] sm:$0xff]
        %v309 = vld [vmem:[#allocation2 + $0x10] sm:$0xff]
        %v310 = vld [vmem:[#allocation2 + $0x18] sm:$0xff]
        %v311 = vld [vmem:[#allocation2 + $0x20] sm:$0xff]
        %v312 = vld [vmem:[#allocation2 + $0x28] sm:$0xff]
        %v313 = vld [vmem:[#allocation2 + $0x30] sm:$0xff]
        %v314 = vld [vmem:[#allocation2 + $0x38] sm:$0xff]
        %v315 = vld [vmem:[#allocation2 + $0x40] sm:$0xff]
        %v316 = vld [vmem:[#allocation2 + $0x48] sm:$0xff]
        %v317 = vld [vmem:[#allocation2 + $0x50] sm:$0xff]
        %v318 = vld [vmem:[#allocation2 + $0x58] sm:$0xff]
        %v319 = vld [vmem:[#allocation2 + $0x60] sm:$0xff]
        %v320 = vld [vmem:[#allocation2 + $0x68] sm:$0xff]
        %v321 = vld [vmem:[#allocation2 + $0x70] sm:$0xff]
        %v322 = vld [vmem:[#allocation2 + $0x78] sm:$0xff]
        %v323 = vld [vmem:[%s231] sm:$0xff]
        %v324 = vld [vmem:[%s231 + $0x8] sm:$0xff]
        %v325 = vld [vmem:[%s231 + $0x10] sm:$0xff]
        %v326 = vld [vmem:[%s231 + $0x18] sm:$0xff]
        %v327 = vld [vmem:[%s231 + $0x20] sm:$0xff]
        %v328 = vld [vmem:[%s231 + $0x28] sm:$0xff]
        %v329 = vld [vmem:[%s231 + $0x30] sm:$0xff]
        %v330 = vld [vmem:[%s231 + $0x38] sm:$0xff]
        %v331 = vld [vmem:[%s231 + $0x40] sm:$0xff]
        %v332 = vld [vmem:[%s231 + $0x48] sm:$0xff]
        %v333 = vld [vmem:[%s231 + $0x50] sm:$0xff]
        %v334 = vld [vmem:[%s231 + $0x58] sm:$0xff]
        %v335 = vld [vmem:[%s231 + $0x60] sm:$0xff]
        %v336 = vld [vmem:[%s231 + $0x68] sm:$0xff]
        %v337 = vld [vmem:[%s231 + $0x70] sm:$0xff]
        %v338 = vld [vmem:[%s231 + $0x78] sm:$0xff]
        %v339 = vld [vmem:[%s240] sm:$0xff]
        %v340 = vld [vmem:[%s240 + $0x8] sm:$0xff]
        %v341 = vld [vmem:[%s240 + $0x10] sm:$0xff]
        %v342 = vld [vmem:[%s240 + $0x18] sm:$0xff]
        %v343 = vld [vmem:[%s240 + $0x20] sm:$0xff]
        %v344 = vld [vmem:[%s240 + $0x28] sm:$0xff]
        %v345 = vld [vmem:[%s240 + $0x30] sm:$0xff]
        %v346 = vld [vmem:[%s240 + $0x38] sm:$0xff]
        %v347 = vld [vmem:[%s240 + $0x40] sm:$0xff]
        %v348 = vld [vmem:[%s240 + $0x48] sm:$0xff]
        %v349 = vld [vmem:[%s240 + $0x50] sm:$0xff]
        %v350 = vld [vmem:[%s240 + $0x58] sm:$0xff]
        %v351 = vld [vmem:[%s240 + $0x60] sm:$0xff]
        %v352 = vld [vmem:[%s240 + $0x68] sm:$0xff]
        %v353 = vld [vmem:[%s240 + $0x70] sm:$0xff]
        %v354 = vld [vmem:[%s240 + $0x78] sm:$0xff]
        %355 = vmatprep.subr.mxu0 0.0
        %356 = vmatpush1.msra.mxu0 %v339
        %357 = vmatprep.subr.mxu0 0.0
        %358 = vmatpush1.msra.mxu0 %v340
        %359 = vmatprep.subr.mxu0 0.0
        %360 = vmatpush1.msra.mxu0 %v341
        %361 = vmatprep.subr.mxu0 0.0
        %362 = vmatpush1.msra.mxu0 %v342
        %363 = vmatprep.subr.mxu0 0.0
        %364 = vmatpush1.msra.mxu0 %v343
        %365 = vmatprep.subr.mxu0 0.0
        %366 = vmatpush1.msra.mxu0 %v344
        %367 = vmatprep.subr.mxu0 0.0
        %368 = vmatpush1.msra.mxu0 %v345
        %369 = vmatprep.subr.mxu0 0.0
        %370 = vmatpush1.msra.mxu0 %v346
        %371 = vmatprep.subr.mxu0 0.0
        %372 = vmatpush1.msra.mxu0 %v347
        %373 = vmatprep.subr.mxu0 0.0
        %374 = vmatpush1.msra.mxu0 %v348
        %375 = vmatprep.subr.mxu0 0.0
        %376 = vmatpush1.msra.mxu0 %v349
        %377 = vmatprep.subr.mxu0 0.0
        %378 = vmatpush1.msra.mxu0 %v350
        %379 = vmatprep.subr.mxu0 0.0
        %380 = vmatpush1.msra.mxu0 %v351
        %381 = vmatprep.subr.mxu0 0.0
        %382 = vmatpush1.msra.mxu0 %v352
        %383 = vmatprep.subr.mxu0 0.0
        %384 = vmatpush1.msra.mxu0 %v353
        %385 = vmatprep.subr.mxu0 0.0
        %386 = vmatpush1.msra.mxu0 %v354
        %387 = vmatprep.subr.mxu0 0.0
        %388 = vmatpush1.msra.mxu0 0.0
        %389 = vmatprep.subr.mxu0 0.0
        %390 = vmatpush1.msra.mxu0 0.0
        %391 = vmatprep.subr.mxu0 0.0
        %392 = vmatpush1.msra.mxu0 0.0
        %393 = vmatprep.subr.mxu0 0.0
        %394 = vmatpush1.msra.mxu0 0.0
        %395 = vmatprep.subr.mxu0 0.0
        %396 = vmatpush1.msra.mxu0 0.0
        %397 = vmatprep.subr.mxu0 0.0
        %398 = vmatpush1.msra.mxu0 0.0
        %399 = vmatprep.subr.mxu0 0.0
        %400 = vmatpush1.msra.mxu0 0.0
        %401 = vmatprep.subr.mxu0 0.0
        %402 = vmatpush1.msra.mxu0 0.0
        %403 = vmatprep.subr.mxu0 0.0
        %404 = vmatpush1.msra.mxu0 0.0
        %405 = vmatprep.subr.mxu0 0.0
        %406 = vmatpush1.msra.mxu0 0.0
        %407 = vmatprep.subr.mxu0 0.0
        %408 = vmatpush1.msra.mxu0 0.0
        %409 = vmatprep.subr.mxu0 0.0
        %410 = vmatpush1.msra.mxu0 0.0
        %411 = vmatprep.subr.mxu0 0.0
        %412 = vmatpush1.msra.mxu0 0.0
        %413 = vmatprep.subr.mxu0 0.0
        %414 = vmatpush1.msra.mxu0 0.0
        %415 = vmatprep.subr.mxu0 0.0
        %416 = vmatpush1.msra.mxu0 0.0
        %417 = vmatprep.subr.mxu0 0.0
        %418 = vmatpush1.msra.mxu0 0.0
        %419 = vmatprep.mubr.f32.mxu0 0.0
        %420 = vmatmul.mubr.f32.gmra.mrb[0].mxu0 %v323
        %v421 = vpop.f32.mrb[0].mxu0
        %v422 = vadd.f32 0.0, %v421
        %v423 = vpop.f32.mrb[0].mxu0
        %424 = vmatprep.mubr.f32.mxu0 0.0
        %425 = vmatmul.mubr.f32.gmra.mrb[0].mxu0 %v324
        %v426 = vpop.f32.mrb[0].mxu0
        %v427 = vadd.f32 0.0, %v426
        %v428 = vpop.f32.mrb[0].mxu0
        %429 = vmatprep.mubr.f32.mxu0 0.0
        %430 = vmatmul.mubr.f32.gmra.mrb[0].mxu0 %v325
        %v431 = vpop.f32.mrb[0].mxu0
        %v432 = vadd.f32 0.0, %v431
        %v433 = vpop.f32.mrb[0].mxu0
        %434 = vmatprep.mubr.f32.mxu0 0.0
        %435 = vmatmul.mubr.f32.gmra.mrb[0].mxu0 %v326
        %v436 = vpop.f32.mrb[0].mxu0
        %v437 = vadd.f32 0.0, %v436
        %v438 = vpop.f32.mrb[0].mxu0
        %439 = vmatprep.mubr.f32.mxu0 0.0
        %440 = vmatmul.mubr.f32.gmra.mrb[0].mxu0 %v327
        %v441 = vpop.f32.mrb[0].mxu0
        %v442 = vadd.f32 0.0, %v441
        %v443 = vpop.f32.mrb[0].mxu0
        %444 = vmatprep.mubr.f32.mxu0 0.0
        %445 = vmatmul.mubr.f32.gmra.mrb[0].mxu0 %v328
        %v446 = vpop.f32.mrb[0].mxu0
        %v447 = vadd.f32 0.0, %v446
        %v448 = vpop.f32.mrb[0].mxu0
        %449 = vmatprep.mubr.f32.mxu0 0.0
        %450 = vmatmul.mubr.f32.gmra.mrb[0].mxu0 %v329
        %v451 = vpop.f32.mrb[0].mxu0
        %v452 = vadd.f32 0.0, %v451
        %v453 = vpop.f32.mrb[0].mxu0
        %454 = vmatprep.mubr.f32.mxu0 0.0
        %455 = vmatmul.mubr.f32.gmra.mrb[0].mxu0 %v330
        %v456 = vpop.f32.mrb[0].mxu0
        %v457 = vadd.f32 0.0, %v456
        %v458 = vpop.f32.mrb[0].mxu0
        %459 = vmatprep.mubr.f32.mxu0 0.0
        %460 = vmatmul.mubr.f32.gmra.mrb[0].mxu0 %v331
        %v461 = vpop.f32.mrb[0].mxu0
        %v462 = vadd.f32 0.0, %v461
        %v463 = vpop.f32.mrb[0].mxu0
        %464 = vmatprep.mubr.f32.mxu0 0.0
        %465 = vmatmul.mubr.f32.gmra.mrb[0].mxu0 %v332
        %v466 = vpop.f32.mrb[0].mxu0
        %v467 = vadd.f32 0.0, %v466
        %v468 = vpop.f32.mrb[0].mxu0
        %469 = vmatprep.mubr.f32.mxu0 0.0
        %470 = vmatmul.mubr.f32.gmra.mrb[0].mxu0 %v333
        %v471 = vpop.f32.mrb[0].mxu0
        %v472 = vadd.f32 0.0, %v471
        %v473 = vpop.f32.mrb[0].mxu0
        %474 = vmatprep.mubr.f32.mxu0 0.0
        %475 = vmatmul.mubr.f32.gmra.mrb[0].mxu0 %v334
        %v476 = vpop.f32.mrb[0].mxu0
        %v477 = vadd.f32 0.0, %v476
        %v478 = vpop.f32.mrb[0].mxu0
        %479 = vmatprep.mubr.f32.mxu0 0.0
        %480 = vmatmul.mubr.f32.gmra.mrb[0].mxu0 %v335
        %v481 = vpop.f32.mrb[0].mxu0
        %v482 = vadd.f32 0.0, %v481
        %v483 = vpop.f32.mrb[0].mxu0
        %484 = vmatprep.mubr.f32.mxu0 0.0
        %485 = vmatmul.mubr.f32.gmra.mrb[0].mxu0 %v336
        %v486 = vpop.f32.mrb[0].mxu0
        %v487 = vadd.f32 0.0, %v486
        %v488 = vpop.f32.mrb[0].mxu0
        %489 = vmatprep.mubr.f32.mxu0 0.0
        %490 = vmatmul.mubr.f32.gmra.mrb[0].mxu0 %v337
        %v491 = vpop.f32.mrb[0].mxu0
        %v492 = vadd.f32 0.0, %v491
        %v493 = vpop.f32.mrb[0].mxu0
        %494 = vmatprep.mubr.f32.mxu0 0.0
        %495 = vmatmul.mubr.f32.gmra.mrb[0].mxu0 %v338
        %v496 = vpop.f32.mrb[0].mxu0
        %v497 = vadd.f32 0.0, %v496
        %v498 = vpop.f32.mrb[0].mxu0
        %499 = vdwg.mxu0
        %v500 = vadd.f32 %v307, %v422
        %v501 = vadd.f32 %v308, %v427
        %v502 = vadd.f32 %v309, %v432
        %v503 = vadd.f32 %v310, %v437
        %v504 = vadd.f32 %v311, %v442
        %v505 = vadd.f32 %v312, %v447
        %v506 = vadd.f32 %v313, %v452
        %v507 = vadd.f32 %v314, %v457
        %v508 = vadd.f32 %v315, %v462
        %v509 = vadd.f32 %v316, %v467
        %v510 = vadd.f32 %v317, %v472
        %v511 = vadd.f32 %v318, %v477
        %v512 = vadd.f32 %v319, %v482
        %v513 = vadd.f32 %v320, %v487
        %v514 = vadd.f32 %v321, %v492
        %v515 = vadd.f32 %v322, %v497
        %vm516 = vcmask 130048
        %517 = vst.msk [vmem:[#allocation2] sm:$0xff] %vm516, %v500
        %518 = vst.msk [vmem:[#allocation2 + $0x8] sm:$0xff] %vm516, %v501
        %519 = vst.msk [vmem:[#allocation2 + $0x10] sm:$0xff] %vm516, %v502
        %520 = vst.msk [vmem:[#allocation2 + $0x18] sm:$0xff] %vm516, %v503
        %521 = vst.msk [vmem:[#allocation2 + $0x20] sm:$0xff] %vm516, %v504
        %522 = vst.msk [vmem:[#allocation2 + $0x28] sm:$0xff] %vm516, %v505
        %523 = vst.msk [vmem:[#allocation2 + $0x30] sm:$0xff] %vm516, %v506
        %524 = vst.msk [vmem:[#allocation2 + $0x38] sm:$0xff] %vm516, %v507
        %525 = vst.msk [vmem:[#allocation2 + $0x40] sm:$0xff] %vm516, %v508
        %526 = vst.msk [vmem:[#allocation2 + $0x48] sm:$0xff] %vm516, %v509
        %527 = vst.msk [vmem:[#allocation2 + $0x50] sm:$0xff] %vm516, %v510
        %528 = vst.msk [vmem:[#allocation2 + $0x58] sm:$0xff] %vm516, %v511
        %529 = vst.msk [vmem:[#allocation2 + $0x60] sm:$0xff] %vm516, %v512
        %530 = vst.msk [vmem:[#allocation2 + $0x68] sm:$0xff] %vm516, %v513
        %531 = vst.msk [vmem:[#allocation2 + $0x70] sm:$0xff] %vm516, %v514
        %532 = vst.msk [vmem:[#allocation2 + $0x78] sm:$0xff] %vm516, %v515
        %p533 = scmp.eq.s32.totalorder %s28, 2
        // Predicated region
        $region49: #{cheb_conv_forward.5} parent=31 // pred_check
          %p534 = pneg %p533
        $region50: #{cheb_conv_forward.5} parent=31 // pred_check_branch
          %536 = sbr.rel (%p534) target = $region52
        $region51: #{cheb_conv_forward.5} parent=31 // pred_region
          %v537 = vld [vmem:[#allocation2] sm:$0xff]
          %v538 = vld [vmem:[#allocation2 + $0x8] sm:$0xff]
          %v539 = vld [vmem:[#allocation2 + $0x10] sm:$0xff]
          %v540 = vld [vmem:[#allocation2 + $0x18] sm:$0xff]
          %v541 = vld [vmem:[#allocation2 + $0x20] sm:$0xff]
          %v542 = vld [vmem:[#allocation2 + $0x28] sm:$0xff]
          %v543 = vld [vmem:[#allocation2 + $0x30] sm:$0xff]
          %v544 = vld [vmem:[#allocation2 + $0x38] sm:$0xff]
          %v545 = vld [vmem:[#allocation2 + $0x40] sm:$0xff]
          %v546 = vld [vmem:[#allocation2 + $0x48] sm:$0xff]
          %v547 = vld [vmem:[#allocation2 + $0x50] sm:$0xff]
          %v548 = vld [vmem:[#allocation2 + $0x58] sm:$0xff]
          %v549 = vld [vmem:[#allocation2 + $0x60] sm:$0xff]
          %v550 = vld [vmem:[#allocation2 + $0x68] sm:$0xff]
          %v551 = vld [vmem:[#allocation2 + $0x70] sm:$0xff]
          %v552 = vld [vmem:[#allocation2 + $0x78] sm:$0xff]
          %v553 = vmul.f32 %v537, 2.0
          %v554 = vmul.f32 %v538, 2.0
          %v555 = vmul.f32 %v539, 2.0
          %v556 = vmul.f32 %v540, 2.0
          %v557 = vmul.f32 %v541, 2.0
          %v558 = vmul.f32 %v542, 2.0
          %v559 = vmul.f32 %v543, 2.0
          %v560 = vmul.f32 %v544, 2.0
          %v561 = vmul.f32 %v545, 2.0
          %v562 = vmul.f32 %v546, 2.0
          %v563 = vmul.f32 %v547, 2.0
          %v564 = vmul.f32 %v548, 2.0
          %v565 = vmul.f32 %v549, 2.0
          %v566 = vmul.f32 %v550, 2.0
          %v567 = vmul.f32 %v551, 2.0
          %v568 = vmul.f32 %v552, 2.0
          %v569 = vld [vmem:[%s249] sm:$0xff]
          %v570 = vld [vmem:[%s249 + $0x8] sm:$0xff]
          %v571 = vld [vmem:[%s249 + $0x10] sm:$0xff]
          %v572 = vld [vmem:[%s249 + $0x18] sm:$0xff]
          %v573 = vld [vmem:[%s249 + $0x20] sm:$0xff]
          %v574 = vld [vmem:[%s249 + $0x28] sm:$0xff]
          %v575 = vld [vmem:[%s249 + $0x30] sm:$0xff]
          %v576 = vld [vmem:[%s249 + $0x38] sm:$0xff]
          %v577 = vld [vmem:[%s249 + $0x40] sm:$0xff]
          %v578 = vld [vmem:[%s249 + $0x48] sm:$0xff]
          %v579 = vld [vmem:[%s249 + $0x50] sm:$0xff]
          %v580 = vld [vmem:[%s249 + $0x58] sm:$0xff]
          %v581 = vld [vmem:[%s249 + $0x60] sm:$0xff]
          %v582 = vld [vmem:[%s249 + $0x68] sm:$0xff]
          %v583 = vld [vmem:[%s249 + $0x70] sm:$0xff]
          %v584 = vld [vmem:[%s249 + $0x78] sm:$0xff]
          %v585 = vmul.f32 %v569, -1.0
          %v586 = vmul.f32 %v570, -1.0
          %v587 = vmul.f32 %v571, -1.0
          %v588 = vmul.f32 %v572, -1.0
          %v589 = vmul.f32 %v573, -1.0
          %v590 = vmul.f32 %v574, -1.0
          %v591 = vmul.f32 %v575, -1.0
          %v592 = vmul.f32 %v576, -1.0
          %v593 = vmul.f32 %v577, -1.0
          %v594 = vmul.f32 %v578, -1.0
          %v595 = vmul.f32 %v579, -1.0
          %v596 = vmul.f32 %v580, -1.0
          %v597 = vmul.f32 %v581, -1.0
          %v598 = vmul.f32 %v582, -1.0
          %v599 = vmul.f32 %v583, -1.0
          %v600 = vmul.f32 %v584, -1.0
          %v601 = vadd.f32 %v553, %v585
          %v602 = vadd.f32 %v554, %v586
          %v603 = vadd.f32 %v555, %v587
          %v604 = vadd.f32 %v556, %v588
          %v605 = vadd.f32 %v557, %v589
          %v606 = vadd.f32 %v558, %v590
          %v607 = vadd.f32 %v559, %v591
          %v608 = vadd.f32 %v560, %v592
          %v609 = vadd.f32 %v561, %v593
          %v610 = vadd.f32 %v562, %v594
          %v611 = vadd.f32 %v563, %v595
          %v612 = vadd.f32 %v564, %v596
          %v613 = vadd.f32 %v565, %v597
          %v614 = vadd.f32 %v566, %v598
          %v615 = vadd.f32 %v567, %v599
          %v616 = vadd.f32 %v568, %v600
          %617 = vst.msk [vmem:[%s281] sm:$0xff] %vm516, %v601
          %618 = vst.msk [vmem:[%s281 + $0x8] sm:$0xff] %vm516, %v602
          %619 = vst.msk [vmem:[%s281 + $0x10] sm:$0xff] %vm516, %v603
          %620 = vst.msk [vmem:[%s281 + $0x18] sm:$0xff] %vm516, %v604
          %621 = vst.msk [vmem:[%s281 + $0x20] sm:$0xff] %vm516, %v605
          %622 = vst.msk [vmem:[%s281 + $0x28] sm:$0xff] %vm516, %v606
          %623 = vst.msk [vmem:[%s281 + $0x30] sm:$0xff] %vm516, %v607
          %624 = vst.msk [vmem:[%s281 + $0x38] sm:$0xff] %vm516, %v608
          %625 = vst.msk [vmem:[%s281 + $0x40] sm:$0xff] %vm516, %v609
          %626 = vst.msk [vmem:[%s281 + $0x48] sm:$0xff] %vm516, %v610
          %627 = vst.msk [vmem:[%s281 + $0x50] sm:$0xff] %vm516, %v611
          %628 = vst.msk [vmem:[%s281 + $0x58] sm:$0xff] %vm516, %v612
          %629 = vst.msk [vmem:[%s281 + $0x60] sm:$0xff] %vm516, %v613
          %630 = vst.msk [vmem:[%s281 + $0x68] sm:$0xff] %vm516, %v614
          %631 = vst.msk [vmem:[%s281 + $0x70] sm:$0xff] %vm516, %v615
          %632 = vst.msk [vmem:[%s281 + $0x78] sm:$0xff] %vm516, %v616
        $region52: #{cheb_conv_forward.5} parent=31 // pred_fallthru
          _
        %s633 = sand.u32 %s123, 1
        %s634 = scalar_lea.sflag [#allocation5], %s633
        %s635 = sand.u32 %s123, 1
        %s636 = smul.addr %s635, 128
        %s637 = scalar_lea.vmem [#allocation9], %s636
        // Predicated region
        $region53: #{cheb_conv_forward.5} parent=31 // pred_check
          %p638 = pneg %p133
        $region54: #{cheb_conv_forward.5} parent=31 // pred_check_branch
          %640 = sbr.rel (%p638) target = $region56
        $region55: #{cheb_conv_forward.5} parent=31 // pred_region
          %s641 = smul.u32 16, %s27
          %s643 = ssub.s32 2048, 2048
          %644 = vsyncadd %s634, %s643
          %s645 = smul.addr %s641, 128
          %s646 = scalar_lea.hbm %s3, %s645
          %s647 = sshll.u32 %s637, 4
          %s648 = int_to_ptr.vmem [resolvable:$true] %s647
          %653 = dma.vmem_to_hbm [thread:$0]  %s648, 2048, %s646, %s634, 128, 128, 8
        $region56: #{cheb_conv_forward.5} parent=31 // pred_fallthru
          _
      $region32: #{cheb_conv_forward.5} parent=5 // pred_fallthru
        _
      %p654 = scmp.le.s32.totalorder 2, %s18
      // Predicated region
      $region57: #{cheb_conv_forward.5} parent=5 // pred_check
        %p655 = pneg %p654
      $region58: #{cheb_conv_forward.5} parent=5 // pred_check_branch
        %657 = sbr.rel (%p655) target = $region60
      $region59: #{cheb_conv_forward.5} parent=5 // pred_region
        %s658 = ssub.s32 %s18, 2
        // Predicated region
        $region61: #{cheb_conv_forward.5} parent=59 // pred_check
          %p659 = pneg %p139
        $region62: #{cheb_conv_forward.5} parent=59 // pred_check_branch
          %661 = sbr.rel (%p659) target = $region64
        $region63: #{cheb_conv_forward.5} parent=59 // pred_region
          %s662 = sand.u32 %s124, 1
          %s663 = scalar_lea.sflag [#allocation5], %s662
          %s664 = sand.u32 %s124, 1
          %s665 = smul.addr %s664, 128
          %s666 = scalar_lea.vmem [#allocation9], %s665
          %667 = dma.done %s663, 2048
        $region64: #{cheb_conv_forward.5} parent=59 // pred_fallthru
          _
      $region60: #{cheb_conv_forward.5} parent=5 // pred_fallthru
        _
    $region6: #{cheb_conv_forward.5} parent=1 // loop_footer
      %s22 = sadd.s32 1, %s18
    $region7: #{cheb_conv_forward.5} parent=1 // loop_footer_branch
      %17 = sbr.rel target = $region3
    $region8: #{cheb_conv_forward.5} parent=1 // loop_exit
      _
    %668 = vsyncpa [#allocation4], 1
    %s669 = scalar_lea.sflag [#allocation4], 1
    %670 = vsyncpa %s669, 1
    %671 = vsyncpa [#allocation7], 1
    %s672 = scalar_lea.sflag [#allocation7], 1
    %673 = vsyncpa %s672, 1
    %674 = vsyncpa [#allocation5], 1
    %s675 = scalar_lea.sflag [#allocation5], 1
    %676 = vsyncpa %s675, 1

// kernel: cheb_conv_forward.7
$region0: #{cheb_conv_forward.7}
  #allocation0 [shape = 'u32[]', space=smem, size = 0x4, offset = 0x4, fixed_abs, tag = 'smem constant byte address 0x4 - core index']
  #allocation1 [shape = 'u32[144,128]{1,0:T(1,128)}', space=vmem, size = 0x12000, scoped, tag = 'internal scratch']
  %s0 = inlined_call_operand.hbm [shape: f32[384,64], index: 0, kind: input, shape index: {}]
  %s1 = inlined_call_operand.hbm [shape: f32[64,128], index: 1, kind: input, shape index: {}]
  %s2 = inlined_call_operand.hbm [shape: f32[1,128], index: 2, kind: input, shape index: {}]
  %s3 = inlined_call_operand.hbm [shape: f32[384,128], index: 3, kind: output, shape index: {}]
  %s4 = sld [smem:[#allocation0]]
  $region57: #{cheb_conv_forward.7} parent=0
    _
  %s6 = ssub.s32 1, %s4
  %s7 = scalar_select 0, %s6, %s4
  $region1: #{cheb_conv_forward.7} parent=0
    #allocation2 [shape = 'u8[131072]{0}', space=vmem, size = 0x20000, scoped, tag = 'input window, operand 0']
    #allocation3 [shape = 's32[2]{0}', space=sflag, size = 0x8, scoped, tag = 'scoped memory for cheb_conv_forward.7']
    #allocation4 [shape = 's32[2]{0}', space=sflag, size = 0x8, scoped, tag = 'scoped memory for cheb_conv_forward.7']
    #allocation5 [shape = 'u8[32768]{0}', space=vmem, size = 0x8000, scoped, tag = 'input window, operand 1, single buffered']
    #allocation6 [shape = 's32[1]{0}', space=sflag, size = 0x4, scoped, tag = 'scoped memory for cheb_conv_forward.7']
    #allocation7 [shape = 'u8[512]{0}', space=vmem, size = 0x400, scoped, tag = 'input window, operand 2, single buffered']
    #allocation8 [shape = 'u8[131072]{0}', space=vmem, size = 0x20000, scoped, tag = 'output window, operand 0']
    %8 = vsyncpa [#allocation3], 0
    %s9 = scalar_lea.sflag [#allocation3], 1
    %10 = vsyncpa %s9, 0
    %11 = vsyncpa [#allocation6], 0
    %12 = vsyncpa [#allocation4], 0
    %s13 = scalar_lea.sflag [#allocation4], 1
    %14 = vsyncpa %s13, 0
    loop: start=0, step=1, limit=5
    $region2: #{cheb_conv_forward.7} parent=1 // loop_pre_header
      _
    $region3: #{cheb_conv_forward.7} parent=1 // loop_header
      %s16 = sphi 0, %s20
      %p17 = scmp.ge.s32.totalorder %s16, 5
      %s26 = sphi 0, %s28
      %s29 = sphi 0, %s26
      %s30 = sphi 0, %s29
      %s46 = sphi 0, %s30
      %s50 = sphi 0, %s50
      %s52 = sphi 0, %s50
      %s53 = sphi 0, %s52
      %s67 = sphi 0, %s53
      %s71 = sphi 0, %s71
      %s73 = sphi 0, %s71
      %s74 = sphi 0, %s73
      %s88 = sphi 0, %s74
      %s94 = sphi 0, %s96
      %s97 = sphi 0, %s94
      %s98 = sphi 0, %s97
      %s114 = sphi 0, %s98
    $region4: #{cheb_conv_forward.7} parent=1 // loop_header_branch
      %19 = sbr.rel (%p17) target = $region8
    $region5: #{cheb_conv_forward.7} parent=1 // loop_body
      %s21 = ssub.s32 %s16, 1
      %s22 = ssub.s32 %s16, 2
      %s23 = sadd.s32 %s16, 1
      %s24 = ssub.s32 %s16, %s23
      %p25 = scmp.eq.s32.totalorder %s24, 0
      %s27 = sadd.s32 %s26, 1
      %s28 = scalar_select %p25, %s26, %s27
      %p31 = pneg %p25
      %p32 = scmp.eq.s32.totalorder %s16, 2
      %p33 = por %p31, %p32
      %p34 = scmp.ne.s32.totalorder %s26, %s29
      %p35 = scmp.eq.s32.totalorder %s16, 0
      %p36 = por %p34, %p35
      %p37 = scmp.ne.s32.totalorder %s26, %s29
      %p38 = scmp.eq.s32.totalorder %s21, 2
      %p39 = por %p37, %p38
      %p40 = scmp.ne.s32.totalorder %s29, %s30
      %p41 = scmp.eq.s32.totalorder %s21, 0
      %p42 = por %p40, %p41
      %p43 = scmp.ne.s32.totalorder %s29, %s30
      %p44 = scmp.eq.s32.totalorder %s22, 2
      %p45 = por %p43, %p44
      %p47 = scmp.ne.s32.totalorder %s30, %s46
      %p48 = scmp.eq.s32.totalorder %s22, 0
      %p49 = por %p47, %p48
      %s51 = sadd.s32 %s50, 1
      %p54 = scmp.eq.s32.totalorder %s16, 2
      %p55 = scmp.ne.s32.totalorder %s50, %s52
      %p56 = scmp.eq.s32.totalorder %s16, 0
      %p57 = por %p55, %p56
      %p58 = scmp.ne.s32.totalorder %s50, %s52
      %p59 = scmp.eq.s32.totalorder %s21, 2
      %p60 = por %p58, %p59
      %p61 = scmp.ne.s32.totalorder %s52, %s53
      %p62 = scmp.eq.s32.totalorder %s21, 0
      %p63 = por %p61, %p62
      %p64 = scmp.ne.s32.totalorder %s52, %s53
      %p65 = scmp.eq.s32.totalorder %s22, 2
      %p66 = por %p64, %p65
      %p68 = scmp.ne.s32.totalorder %s53, %s67
      %p69 = scmp.eq.s32.totalorder %s22, 0
      %p70 = por %p68, %p69
      %s72 = sadd.s32 %s71, 1
      %p75 = scmp.eq.s32.totalorder %s16, 2
      %p76 = scmp.ne.s32.totalorder %s71, %s73
      %p77 = scmp.eq.s32.totalorder %s16, 0
      %p78 = por %p76, %p77
      %p79 = scmp.ne.s32.totalorder %s71, %s73
      %p80 = scmp.eq.s32.totalorder %s21, 2
      %p81 = por %p79, %p80
      %p82 = scmp.ne.s32.totalorder %s73, %s74
      %p83 = scmp.eq.s32.totalorder %s21, 0
      %p84 = por %p82, %p83
      %p85 = scmp.ne.s32.totalorder %s73, %s74
      %p86 = scmp.eq.s32.totalorder %s22, 2
      %p87 = por %p85, %p86
      %p89 = scmp.ne.s32.totalorder %s74, %s88
      %p90 = scmp.eq.s32.totalorder %s22, 0
      %p91 = por %p89, %p90
      %s92 = ssub.s32 %s16, %s23
      %p93 = scmp.eq.s32.totalorder %s92, 0
      %s95 = sadd.s32 %s94, 1
      %s96 = scalar_select %p93, %s94, %s95
      %p99 = pneg %p93
      %p100 = scmp.eq.s32.totalorder %s16, 2
      %p101 = por %p99, %p100
      %p102 = scmp.ne.s32.totalorder %s94, %s97
      %p103 = scmp.eq.s32.totalorder %s16, 0
      %p104 = por %p102, %p103
      %p105 = scmp.ne.s32.totalorder %s94, %s97
      %p106 = scmp.eq.s32.totalorder %s21, 2
      %p107 = por %p105, %p106
      %p108 = scmp.ne.s32.totalorder %s97, %s98
      %p109 = scmp.eq.s32.totalorder %s21, 0
      %p110 = por %p108, %p109
      %p111 = scmp.ne.s32.totalorder %s97, %s98
      %p112 = scmp.eq.s32.totalorder %s22, 2
      %p113 = por %p111, %p112
      %p115 = scmp.ne.s32.totalorder %s98, %s114
      %p116 = scmp.eq.s32.totalorder %s22, 0
      %p117 = por %p115, %p116
      %p118 = scmp.le.s32.totalorder 1, %s16
      %p119 = scmp.lt.s32.totalorder %s16, 4
      %p120 = pnand %p118, %p119
      %p121 = pneg %p120
      // Predicated region
      $region9: #{cheb_conv_forward.7} parent=5 // pred_check
        _
      $region10: #{cheb_conv_forward.7} parent=5 // pred_check_branch
        %123 = sbr.rel (%p120) target = $region12
      $region11: #{cheb_conv_forward.7} parent=5 // pred_region
        %s124 = ssub.s32 %s16, 1
        // Predicated region
        $region13: #{cheb_conv_forward.7} parent=11 // pred_check
          %p125 = pneg %p63
        $region14: #{cheb_conv_forward.7} parent=11 // pred_check_branch
          %127 = sbr.rel (%p125) target = $region16
        $region15: #{cheb_conv_forward.7} parent=11 // pred_region
          %s129 = ssub.s32 1024, 1024
          %130 = vsyncadd [#allocation6], %s129
          %s131 = sshll.u32 [#allocation5], 4
          %s132 = int_to_ptr.vmem [resolvable:$true] %s131
          %137 = dma.hbm_to_vmem [thread:$0]  %s1, 1024, %s132, [#allocation6], 128, 128, 8
        $region16: #{cheb_conv_forward.7} parent=11 // pred_fallthru
          _
        // Predicated region
        $region17: #{cheb_conv_forward.7} parent=11 // pred_check
          %p138 = pneg %p84
        $region18: #{cheb_conv_forward.7} parent=11 // pred_check_branch
          %140 = sbr.rel (%p138) target = $region20
        $region19: #{cheb_conv_forward.7} parent=11 // pred_region
          %s142 = ssub.s32 16, 16
          %143 = vsyncadd [#allocation6], %s142
          %s145 = sshll.u32 [#allocation7], 4
          %s146 = int_to_ptr.vmem [resolvable:$true] %s145
          %148 = dma.hbm_to_vmem [thread:$0]  %s2, 16, %s146, [#allocation6]
        $region20: #{cheb_conv_forward.7} parent=11 // pred_fallthru
          _
      $region12: #{cheb_conv_forward.7} parent=5 // pred_fallthru
        _
      %p149 = scmp.lt.s32.totalorder %s16, 3
      // Predicated region
      $region21: #{cheb_conv_forward.7} parent=5 // pred_check
        %p150 = pneg %p149
      $region22: #{cheb_conv_forward.7} parent=5 // pred_check_branch
        %152 = sbr.rel (%p150) target = $region24
      $region23: #{cheb_conv_forward.7} parent=5 // pred_region
        // Predicated region
        $region25: #{cheb_conv_forward.7} parent=23 // pred_check
          %p153 = pneg %p36
        $region26: #{cheb_conv_forward.7} parent=23 // pred_check_branch
          %155 = sbr.rel (%p153) target = $region28
        $region27: #{cheb_conv_forward.7} parent=23 // pred_region
          %s156 = sand.u32 %s26, 1
          %s157 = scalar_lea.sflag [#allocation3], %s156
          %s158 = sand.u32 %s26, 1
          %s159 = smul.addr %s158, 128
          %s160 = scalar_lea.vmem [#allocation2], %s159
          %s161 = smul.u32 16, %s16
          %s163 = ssub.s32 2048, 2048
          %164 = vsyncadd %s157, %s163
          %s165 = smul.addr %s161, 128
          %s166 = scalar_lea.hbm %s0, %s165
          %s167 = sshll.u32 %s160, 4
          %s168 = int_to_ptr.vmem [resolvable:$true] %s167
          %173 = dma.hbm_to_vmem [thread:$0]  %s166, 2048, %s168, %s157, 128, 128, 8
        $region28: #{cheb_conv_forward.7} parent=23 // pred_fallthru
          _
      $region24: #{cheb_conv_forward.7} parent=5 // pred_fallthru
        _
      %p174 = scmp.le.s32.totalorder 1, %s16
      %p175 = scmp.lt.s32.totalorder %s16, 4
      %p176 = pnand %p174, %p175
      %p177 = pneg %p176
      // Predicated region
      $region29: #{cheb_conv_forward.7} parent=5 // pred_check
        _
      $region30: #{cheb_conv_forward.7} parent=5 // pred_check_branch
        %179 = sbr.rel (%p176) target = $region32
      $region31: #{cheb_conv_forward.7} parent=5 // pred_region
        %s180 = ssub.s32 %s16, 1
        %s181 = sand.u32 %s29, 1
        %s182 = scalar_lea.sflag [#allocation3], %s181
        %s183 = sand.u32 %s29, 1
        %s184 = smul.addr %s183, 128
        %s185 = scalar_lea.vmem [#allocation2], %s184
        // Predicated region
        $region33: #{cheb_conv_forward.7} parent=31 // pred_check
          %p186 = pneg %p42
        $region34: #{cheb_conv_forward.7} parent=31 // pred_check_branch
          %188 = sbr.rel (%p186) target = $region36
        $region35: #{cheb_conv_forward.7} parent=31 // pred_region
          %189 = dma.done %s182, 2048
        $region36: #{cheb_conv_forward.7} parent=31 // pred_fallthru
          _
        // Predicated region
        $region37: #{cheb_conv_forward.7} parent=31 // pred_check
          %p190 = pneg %p63
        $region38: #{cheb_conv_forward.7} parent=31 // pred_check_branch
          %192 = sbr.rel (%p190) target = $region40
        $region39: #{cheb_conv_forward.7} parent=31 // pred_region
          %193 = dma.done [#allocation6], 1024
        $region40: #{cheb_conv_forward.7} parent=31 // pred_fallthru
          _
        // Predicated region
        $region41: #{cheb_conv_forward.7} parent=31 // pred_check
          %p194 = pneg %p84
        $region42: #{cheb_conv_forward.7} parent=31 // pred_check_branch
          %196 = sbr.rel (%p194) target = $region44
        $region43: #{cheb_conv_forward.7} parent=31 // pred_region
          %197 = dma.done [#allocation6], 16
        $region44: #{cheb_conv_forward.7} parent=31 // pred_fallthru
          _
        %s198 = sand.u32 %s29, 1
        %s199 = scalar_lea.sflag [#allocation3], %s198
        %s200 = sand.u32 %s29, 1
        %s201 = smul.addr %s200, 128
        %s202 = scalar_lea.vmem [#allocation2], %s201
        %p203 = pneg %p42
        %p204 = pneg %p39
        %p205 = pneg %p63
        %p206 = pneg %p60
        %p207 = pneg %p84
        %p208 = pneg %p81
        %p209 = pneg %p110
        %p210 = pneg %p107
        %s211 = sand.u32 %s97, 1
        %s212 = scalar_lea.sflag [#allocation4], %s211
        %s213 = sand.u32 %s97, 1
        %s214 = smul.addr %s213, 128
        %s215 = scalar_lea.vmem [#allocation8], %s214
        %s216 = smul.u32 16, %s21
        %s217 = smul.u32 16, %s21
        %v218 = vld [vmem:[%s185] sm:$0xff]
        %v219 = vld [vmem:[%s185 + $0x8] sm:$0xff]
        %v220 = vld [vmem:[%s185 + $0x10] sm:$0xff]
        %v221 = vld [vmem:[%s185 + $0x18] sm:$0xff]
        %v222 = vld [vmem:[%s185 + $0x20] sm:$0xff]
        %v223 = vld [vmem:[%s185 + $0x28] sm:$0xff]
        %v224 = vld [vmem:[%s185 + $0x30] sm:$0xff]
        %v225 = vld [vmem:[%s185 + $0x38] sm:$0xff]
        %v226 = vld [vmem:[%s185 + $0x40] sm:$0xff]
        %v227 = vld [vmem:[%s185 + $0x48] sm:$0xff]
        %v228 = vld [vmem:[%s185 + $0x50] sm:$0xff]
        %v229 = vld [vmem:[%s185 + $0x58] sm:$0xff]
        %v230 = vld [vmem:[%s185 + $0x60] sm:$0xff]
        %v231 = vld [vmem:[%s185 + $0x68] sm:$0xff]
        %v232 = vld [vmem:[%s185 + $0x70] sm:$0xff]
        %v233 = vld [vmem:[%s185 + $0x78] sm:$0xff]
        %v234 = vld [vmem:[#allocation5] sm:$0xff]
        %v235 = vld [vmem:[#allocation5 + $0x8] sm:$0xff]
        %v236 = vld [vmem:[#allocation5 + $0x10] sm:$0xff]
        %v237 = vld [vmem:[#allocation5 + $0x18] sm:$0xff]
        %v238 = vld [vmem:[#allocation5 + $0x20] sm:$0xff]
        %v239 = vld [vmem:[#allocation5 + $0x28] sm:$0xff]
        %v240 = vld [vmem:[#allocation5 + $0x30] sm:$0xff]
        %v241 = vld [vmem:[#allocation5 + $0x38] sm:$0xff]
        %v242 = vld [vmem:[#allocation7] sm:$0x1]
        %v244 = vlaneseq
        %v245 = vshrl.u32 %v244, 7
        %v246 = vsub.s32 0, %v245
        %v247 = vrot.slane %v242, %v246
        %vm249 = vcmask 523264
        %v251 = vsel %vm249, %v218, 0
        %v254 = vsel %vm249, %v219, 0
        %v257 = vsel %vm249, %v220, 0
        %v260 = vsel %vm249, %v221, 0
        %v263 = vsel %vm249, %v222, 0
        %v266 = vsel %vm249, %v223, 0
        %v269 = vsel %vm249, %v224, 0
        %v272 = vsel %vm249, %v225, 0
        %v275 = vsel %vm249, %v226, 0
        %v278 = vsel %vm249, %v227, 0
        %v281 = vsel %vm249, %v228, 0
        %v284 = vsel %vm249, %v229, 0
        %v287 = vsel %vm249, %v230, 0
        %v290 = vsel %vm249, %v231, 0
        %v293 = vsel %vm249, %v232, 0
        %v296 = vsel %vm249, %v233, 0
        %298 = vmatprep.subr.mxu0 0.0
        %299 = vmatpush1.msra.mxu0 %v234
        %300 = vmatprep.subr.mxu0 0.0
        %301 = vmatpush1.msra.mxu0 %v235
        %302 = vmatprep.subr.mxu0 0.0
        %303 = vmatpush1.msra.mxu0 %v236
        %304 = vmatprep.subr.mxu0 0.0
        %305 = vmatpush1.msra.mxu0 %v237
        %306 = vmatprep.subr.mxu0 0.0
        %307 = vmatpush1.msra.mxu0 %v238
        %308 = vmatprep.subr.mxu0 0.0
        %309 = vmatpush1.msra.mxu0 %v239
        %310 = vmatprep.subr.mxu0 0.0
        %311 = vmatpush1.msra.mxu0 %v240
        %312 = vmatprep.subr.mxu0 0.0
        %313 = vmatpush1.msra.mxu0 %v241
        %314 = vmatprep.subr.mxu0 0.0
        %315 = vmatpush1.msra.mxu0 0.0
        %316 = vmatprep.subr.mxu0 0.0
        %317 = vmatpush1.msra.mxu0 0.0
        %318 = vmatprep.subr.mxu0 0.0
        %319 = vmatpush1.msra.mxu0 0.0
        %320 = vmatprep.subr.mxu0 0.0
        %321 = vmatpush1.msra.mxu0 0.0
        %322 = vmatprep.subr.mxu0 0.0
        %323 = vmatpush1.msra.mxu0 0.0
        %324 = vmatprep.subr.mxu0 0.0
        %325 = vmatpush1.msra.mxu0 0.0
        %326 = vmatprep.subr.mxu0 0.0
        %327 = vmatpush1.msra.mxu0 0.0
        %328 = vmatprep.subr.mxu0 0.0
        %329 = vmatpush1.msra.mxu0 0.0
        %330 = vmatprep.subr.mxu0 0.0
        %331 = vmatpush1.msra.mxu0 0.0
        %332 = vmatprep.subr.mxu0 0.0
        %333 = vmatpush1.msra.mxu0 0.0
        %334 = vmatprep.subr.mxu0 0.0
        %335 = vmatpush1.msra.mxu0 0.0
        %336 = vmatprep.subr.mxu0 0.0
        %337 = vmatpush1.msra.mxu0 0.0
        %338 = vmatprep.subr.mxu0 0.0
        %339 = vmatpush1.msra.mxu0 0.0
        %340 = vmatprep.subr.mxu0 0.0
        %341 = vmatpush1.msra.mxu0 0.0
        %342 = vmatprep.subr.mxu0 0.0
        %343 = vmatpush1.msra.mxu0 0.0
        %344 = vmatprep.subr.mxu0 0.0
        %345 = vmatpush1.msra.mxu0 0.0
        %346 = vmatprep.subr.mxu0 0.0
        %347 = vmatpush1.msra.mxu0 0.0
        %348 = vmatprep.subr.mxu0 0.0
        %349 = vmatpush1.msra.mxu0 0.0
        %350 = vmatprep.subr.mxu0 0.0
        %351 = vmatpush1.msra.mxu0 0.0
        %352 = vmatprep.subr.mxu0 0.0
        %353 = vmatpush1.msra.mxu0 0.0
        %354 = vmatprep.subr.mxu0 0.0
        %355 = vmatpush1.msra.mxu0 0.0
        %356 = vmatprep.subr.mxu0 0.0
        %357 = vmatpush1.msra.mxu0 0.0
        %358 = vmatprep.subr.mxu0 0.0
        %359 = vmatpush1.msra.mxu0 0.0
        %360 = vmatprep.subr.mxu0 0.0
        %361 = vmatpush1.msra.mxu0 0.0
        %362 = vmatprep.mubr.f32.mxu0 0.0
        %363 = vmatmul.mubr.f32.gmra.mrb[0].mxu0 %v251
        %v364 = vpop.f32.mrb[0].mxu0
        %v365 = vadd.f32 %v247, %v364
        %v366 = vpop.f32.mrb[0].mxu0
        %367 = vmatprep.mubr.f32.mxu0 0.0
        %368 = vmatmul.mubr.f32.gmra.mrb[0].mxu0 %v254
        %v369 = vpop.f32.mrb[0].mxu0
        %v370 = vadd.f32 %v247, %v369
        %v371 = vpop.f32.mrb[0].mxu0
        %372 = vmatprep.mubr.f32.mxu0 0.0
        %373 = vmatmul.mubr.f32.gmra.mrb[0].mxu0 %v257
        %v374 = vpop.f32.mrb[0].mxu0
        %v375 = vadd.f32 %v247, %v374
        %v376 = vpop.f32.mrb[0].mxu0
        %377 = vmatprep.mubr.f32.mxu0 0.0
        %378 = vmatmul.mubr.f32.gmra.mrb[0].mxu0 %v260
        %v379 = vpop.f32.mrb[0].mxu0
        %v380 = vadd.f32 %v247, %v379
        %v381 = vpop.f32.mrb[0].mxu0
        %382 = vmatprep.mubr.f32.mxu0 0.0
        %383 = vmatmul.mubr.f32.gmra.mrb[0].mxu0 %v263
        %v384 = vpop.f32.mrb[0].mxu0
        %v385 = vadd.f32 %v247, %v384
        %v386 = vpop.f32.mrb[0].mxu0
        %387 = vmatprep.mubr.f32.mxu0 0.0
        %388 = vmatmul.mubr.f32.gmra.mrb[0].mxu0 %v266
        %v389 = vpop.f32.mrb[0].mxu0
        %v390 = vadd.f32 %v247, %v389
        %v391 = vpop.f32.mrb[0].mxu0
        %392 = vmatprep.mubr.f32.mxu0 0.0
        %393 = vmatmul.mubr.f32.gmra.mrb[0].mxu0 %v269
        %v394 = vpop.f32.mrb[0].mxu0
        %v395 = vadd.f32 %v247, %v394
        %v396 = vpop.f32.mrb[0].mxu0
        %397 = vmatprep.mubr.f32.mxu0 0.0
        %398 = vmatmul.mubr.f32.gmra.mrb[0].mxu0 %v272
        %v399 = vpop.f32.mrb[0].mxu0
        %v400 = vadd.f32 %v247, %v399
        %v401 = vpop.f32.mrb[0].mxu0
        %402 = vmatprep.mubr.f32.mxu0 0.0
        %403 = vmatmul.mubr.f32.gmra.mrb[0].mxu0 %v275
        %v404 = vpop.f32.mrb[0].mxu0
        %v405 = vadd.f32 %v247, %v404
        %v406 = vpop.f32.mrb[0].mxu0
        %407 = vmatprep.mubr.f32.mxu0 0.0
        %408 = vmatmul.mubr.f32.gmra.mrb[0].mxu0 %v278
        %v409 = vpop.f32.mrb[0].mxu0
        %v410 = vadd.f32 %v247, %v409
        %v411 = vpop.f32.mrb[0].mxu0
        %412 = vmatprep.mubr.f32.mxu0 0.0
        %413 = vmatmul.mubr.f32.gmra.mrb[0].mxu0 %v281
        %v414 = vpop.f32.mrb[0].mxu0
        %v415 = vadd.f32 %v247, %v414
        %v416 = vpop.f32.mrb[0].mxu0
        %417 = vmatprep.mubr.f32.mxu0 0.0
        %418 = vmatmul.mubr.f32.gmra.mrb[0].mxu0 %v284
        %v419 = vpop.f32.mrb[0].mxu0
        %v420 = vadd.f32 %v247, %v419
        %v421 = vpop.f32.mrb[0].mxu0
        %422 = vmatprep.mubr.f32.mxu0 0.0
        %423 = vmatmul.mubr.f32.gmra.mrb[0].mxu0 %v287
        %v424 = vpop.f32.mrb[0].mxu0
        %v425 = vadd.f32 %v247, %v424
        %v426 = vpop.f32.mrb[0].mxu0
        %427 = vmatprep.mubr.f32.mxu0 0.0
        %428 = vmatmul.mubr.f32.gmra.mrb[0].mxu0 %v290
        %v429 = vpop.f32.mrb[0].mxu0
        %v430 = vadd.f32 %v247, %v429
        %v431 = vpop.f32.mrb[0].mxu0
        %432 = vmatprep.mubr.f32.mxu0 0.0
        %433 = vmatmul.mubr.f32.gmra.mrb[0].mxu0 %v293
        %v434 = vpop.f32.mrb[0].mxu0
        %v435 = vadd.f32 %v247, %v434
        %v436 = vpop.f32.mrb[0].mxu0
        %437 = vmatprep.mubr.f32.mxu0 0.0
        %438 = vmatmul.mubr.f32.gmra.mrb[0].mxu0 %v296
        %v439 = vpop.f32.mrb[0].mxu0
        %v440 = vadd.f32 %v247, %v439
        %v441 = vpop.f32.mrb[0].mxu0
        %442 = vdwg.mxu0
        %443 = vst [vmem:[%s215] sm:$0xff] %v365
        %444 = vst [vmem:[%s215 + $0x8] sm:$0xff] %v370
        %445 = vst [vmem:[%s215 + $0x10] sm:$0xff] %v375
        %446 = vst [vmem:[%s215 + $0x18] sm:$0xff] %v380
        %447 = vst [vmem:[%s215 + $0x20] sm:$0xff] %v385
        %448 = vst [vmem:[%s215 + $0x28] sm:$0xff] %v390
        %449 = vst [vmem:[%s215 + $0x30] sm:$0xff] %v395
        %450 = vst [vmem:[%s215 + $0x38] sm:$0xff] %v400
        %451 = vst [vmem:[%s215 + $0x40] sm:$0xff] %v405
        %452 = vst [vmem:[%s215 + $0x48] sm:$0xff] %v410
        %453 = vst [vmem:[%s215 + $0x50] sm:$0xff] %v415
        %454 = vst [vmem:[%s215 + $0x58] sm:$0xff] %v420
        %455 = vst [vmem:[%s215 + $0x60] sm:$0xff] %v425
        %456 = vst [vmem:[%s215 + $0x68] sm:$0xff] %v430
        %457 = vst [vmem:[%s215 + $0x70] sm:$0xff] %v435
        %458 = vst [vmem:[%s215 + $0x78] sm:$0xff] %v440
        %s459 = sand.u32 %s97, 1
        %s460 = scalar_lea.sflag [#allocation4], %s459
        %s461 = sand.u32 %s97, 1
        %s462 = smul.addr %s461, 128
        %s463 = scalar_lea.vmem [#allocation8], %s462
        // Predicated region
        $region45: #{cheb_conv_forward.7} parent=31 // pred_check
          %p464 = pneg %p107
        $region46: #{cheb_conv_forward.7} parent=31 // pred_check_branch
          %466 = sbr.rel (%p464) target = $region48
        $region47: #{cheb_conv_forward.7} parent=31 // pred_region
          %s467 = smul.u32 16, %s21
          %s469 = ssub.s32 2048, 2048
          %470 = vsyncadd %s460, %s469
          %s471 = smul.addr %s467, 128
          %s472 = scalar_lea.hbm %s3, %s471
          %s473 = sshll.u32 %s463, 4
          %s474 = int_to_ptr.vmem [resolvable:$true] %s473
          %479 = dma.vmem_to_hbm [thread:$0]  %s474, 2048, %s472, %s460, 128, 128, 8
        $region48: #{cheb_conv_forward.7} parent=31 // pred_fallthru
          _
      $region32: #{cheb_conv_forward.7} parent=5 // pred_fallthru
        _
      %p480 = scmp.le.s32.totalorder 2, %s16
      // Predicated region
      $region49: #{cheb_conv_forward.7} parent=5 // pred_check
        %p481 = pneg %p480
      $region50: #{cheb_conv_forward.7} parent=5 // pred_check_branch
        %483 = sbr.rel (%p481) target = $region52
      $region51: #{cheb_conv_forward.7} parent=5 // pred_region
        %s484 = ssub.s32 %s16, 2
        // Predicated region
        $region53: #{cheb_conv_forward.7} parent=51 // pred_check
          %p485 = pneg %p113
        $region54: #{cheb_conv_forward.7} parent=51 // pred_check_branch
          %487 = sbr.rel (%p485) target = $region56
        $region55: #{cheb_conv_forward.7} parent=51 // pred_region
          %s488 = sand.u32 %s98, 1
          %s489 = scalar_lea.sflag [#allocation4], %s488
          %s490 = sand.u32 %s98, 1
          %s491 = smul.addr %s490, 128
          %s492 = scalar_lea.vmem [#allocation8], %s491
          %493 = dma.done %s489, 2048
        $region56: #{cheb_conv_forward.7} parent=51 // pred_fallthru
          _
      $region52: #{cheb_conv_forward.7} parent=5 // pred_fallthru
        _
    $region6: #{cheb_conv_forward.7} parent=1 // loop_footer
      %s20 = sadd.s32 1, %s16
    $region7: #{cheb_conv_forward.7} parent=1 // loop_footer_branch
      %15 = sbr.rel target = $region3
    $region8: #{cheb_conv_forward.7} parent=1 // loop_exit
      _
    %494 = vsyncpa [#allocation3], 1
    %s495 = scalar_lea.sflag [#allocation3], 1
    %496 = vsyncpa %s495, 1
    %497 = vsyncpa [#allocation6], 1
    %498 = vsyncpa [#allocation4], 1
    %s499 = scalar_lea.sflag [#allocation4], 1
    %500 = vsyncpa %s499, 1

</llo_original>
